<compile_context>
chip_gen: v6e
topology: v6e:2x2x1
jax: 0.10.0
libtpu: 0.0.40
codegen_flags: <defaults>
</compile_context>

<pallas_src>
import jax
import jax.numpy as jnp
from jax import lax
from jax.experimental import pallas as pl
from jax.experimental.pallas import tpu as pltpu


def make_akirnn_kernel(layers, hidden, seq_len, batch_tile):
    H, T, Bt = hidden, seq_len, batch_tile

    def kernel(x_ref, len_ref, w_ih0_ref, w_hh0_ref, b0_ref,
               w_ih_r_ref, w_hh_r_ref, b_r_ref,
               w_fc_h_ref, b_head_ref, w_fc1_ref, b_fc1_ref, out_ref):
        # ---- loop-invariant loads / constants (hoisted out of the recurrence) ----
        lengths = len_ref[...]                                  # (Bt, 1) int32
        w_hh0 = w_hh0_ref[...]                                  # (H, 4H) bf16
        w_ih_r = [w_ih_r_ref[l] for l in range(layers - 1)]     # (H, 4H) bf16 each
        w_hh_r = [w_hh_r_ref[l] for l in range(layers - 1)]
        b_r = [b_r_ref[l] for l in range(layers - 1)]           # (1, 4H) f32 each

        # per-lane (sig, sig, tanh, sig) constants generated in-kernel (no DMA);
        # the 2x pre-scale of the g-gate is already folded into the weights.
        lane = lax.broadcasted_iota(jnp.int32, (1, 4 * H), 1)
        is_g = (lane >= 2 * H) & (lane < 3 * H)
        gscale = jnp.where(is_g, 2.0, 1.0).astype(jnp.float32)
        goff = jnp.where(is_g, -1.0, 0.0).astype(jnp.float32)

        # ---- layer-0 input projections for ALL timesteps in ONE matmul ----
        x = x_ref[...]                                          # (T, Bt, D) bf16
        d_in = x.shape[-1]
        xproj = (jnp.dot(x.reshape(T * Bt, d_in), w_ih0_ref[...],
                         preferred_element_type=jnp.float32)
                 + b0_ref[...])                                 # (T*Bt, 4H) f32
        xproj = xproj.reshape(T, Bt, 4 * H)                     # tile-aligned [t] index

        def gate_act(g):
            # one EUP call for all four gates: tanh(x) = 2*sigmoid(2x) - 1 on
            # the g-gate lanes (2x already folded into the weights).
            return jax.nn.sigmoid(g) * gscale + goff

        def lstm_cell(act, c_prev):
            i_g = act[:, 0:H]
            f_g = act[:, H:2 * H]
            g_g = act[:, 2 * H:3 * H]
            o_g = act[:, 3 * H:4 * H]
            c_new = f_g * c_prev + i_g * g_g
            h_new = o_g * jnp.tanh(c_new)
            return h_new, c_new

        hs = [jnp.zeros((Bt, H), jnp.float32) for _ in range(layers)]
        cs = [jnp.zeros((Bt, H), jnp.float32) for _ in range(layers)]

        # Fully unrolled time loop (T static & small) so the scheduler can
        # wavefront-overlap layer l of step t with layer l-1 of step t+1.
        for t in range(T):
            keep = jnp.broadcast_to(lengths > t, (Bt, H))       # one broadcast / step
            # layer 0: only the recurrent matmul remains per step
            g0 = xproj[t] + jnp.dot(hs[0].astype(jnp.bfloat16), w_hh0,
                                    preferred_element_type=jnp.float32)
            h_new, c_new = lstm_cell(gate_act(g0), cs[0])
            hs[0] = jnp.where(keep, h_new, hs[0])
            cs[0] = jnp.where(keep, c_new, cs[0])
            # layers >= 1: two K=H matmuls (no per-step cross-lane concat)
            for l in range(1, layers):
                g = (jnp.dot(hs[l - 1].astype(jnp.bfloat16), w_ih_r[l - 1],
                             preferred_element_type=jnp.float32)
                     + jnp.dot(hs[l].astype(jnp.bfloat16), w_hh_r[l - 1],
                               preferred_element_type=jnp.float32)
                     + b_r[l - 1])
                h_new, c_new = lstm_cell(gate_act(g), cs[l])
                hs[l] = jnp.where(keep, h_new, hs[l])
                cs[l] = jnp.where(keep, c_new, cs[l])

        ends = hs[layers - 1]                                   # h_n[-1]: (Bt, H)

        # ---- head (one-shot, off the serial hot path; f32 for parity) ----
        # x2 @ w_fc_x2 and b_fc are prefolded into b_head in the wrapper, so
        # there is no lane concat and no odd-K contraction here.
        mid = (jnp.dot(ends, w_fc_h_ref[...],
                       preferred_element_type=jnp.float32) + b_head_ref[...])
        mid = jnp.where(mid >= 0, mid, 0.01 * mid)              # LeakyReLU(0.01)
        out = (jnp.dot(mid, w_fc1_ref[...],
                       preferred_element_type=jnp.float32) + b_fc1_ref[...])
        out_ref[...] = out.astype(out_ref.dtype)                # lane-dense store

    return kernel


def init_params(key, input_size, hidden_size, output_size, mid_size, layers):
    """Deterministic synthetic parameters, same shapes as the PyTorch module."""
    params = {"layers": layers, "hidden": hidden_size}
    ks = list(jax.random.split(key, 4 * layers + 4))
    lstm = []
    for l in range(layers):
        d_in = input_size if l == 0 else hidden_size
        w_ih = jax.random.normal(ks[4 * l + 0], (4 * hidden_size, d_in), jnp.float32) * 0.1
        w_hh = jax.random.normal(ks[4 * l + 1], (4 * hidden_size, hidden_size), jnp.float32) * 0.1
        b_ih = jax.random.normal(ks[4 * l + 2], (4 * hidden_size,), jnp.float32) * 0.1
        b_hh = jax.random.normal(ks[4 * l + 3], (4 * hidden_size,), jnp.float32) * 0.1
        lstm.append((w_ih, w_hh, b_ih, b_hh))
    params["lstm"] = lstm
    params["w_fc"] = jax.random.normal(ks[-4], (mid_size, hidden_size + 2), jnp.float32) * 0.1
    params["b_fc"] = jax.random.normal(ks[-3], (mid_size,), jnp.float32) * 0.1
    params["w_fc1"] = jax.random.normal(ks[-2], (output_size, mid_size), jnp.float32) * 0.1
    params["b_fc1"] = jax.random.normal(ks[-1], (output_size,), jnp.float32) * 0.1
    return params


def akirnn_forward(x1_padded, x2, lengths, params, batch_tile=128):
    B, T, D = x1_padded.shape
    layers = params["layers"]
    H = params["hidden"]
    mid_size = params["w_fc"].shape[0]
    out_size = params["w_fc1"].shape[0]
    out_pad = -(-out_size // 128) * 128          # lane-dense output width (>=128)

    # ---- batch tiling: pad to an 8-aligned tile and grid over batch tiles ----
    # Per-step recurrence cost is ~flat up to M~128-256 rows, so batching is the
    # big lever; tile capped at 128 rows (also comfortable in v7x's 64 MiB VMEM).
    Bt = max(8, min(batch_tile, -(-B // 8) * 8))
    Bt = (Bt // 8) * 8
    B_pad = -(-B // Bt) * Bt
    nb = B_pad // Bt
    pad_b = B_pad - B

    # ---- one-time glue (plain XLA, outside the kernel) ----
    x_tm = jnp.transpose(x1_padded, (1, 0, 2)).astype(jnp.bfloat16)   # (T, B, D)
    x2f = x2.astype(jnp.float32)
    lens = lengths.astype(jnp.int32)
    if pad_b:
        x_tm = jnp.pad(x_tm, ((0, 0), (0, pad_b), (0, 0)))
        x2f = jnp.pad(x2f, ((0, pad_b), (0, 0)))
        lens = jnp.pad(lens, (0, pad_b))       # padded rows: length 0 -> h frozen at 0
    lens2d = lens.reshape(B_pad, 1)

    # fold the g-gate 2x pre-scale (tanh(x) = 2*sigmoid(2x) - 1) into weights/biases
    def fold_g(w):                              # (K, 4H): scale cols [2H:3H] by 2
        return w.at[:, 2 * H:3 * H].multiply(2.0)

    w_ih0, w_hh0, b_ih0, b_hh0 = params["lstm"][0]
    w_ih0T = fold_g(jnp.transpose(w_ih0)).astype(jnp.bfloat16)         # (D, 4H)
    w_hh0T = fold_g(jnp.transpose(w_hh0)).astype(jnp.bfloat16)         # (H, 4H)
    b0 = fold_g((b_ih0 + b_hh0).reshape(1, 4 * H)).astype(jnp.float32)  # (1, 4H)

    # layers >= 1: stacked into single operands (fewer tiny DMAs)
    if layers > 1:
        w_ih_rest = jnp.stack([fold_g(jnp.transpose(params["lstm"][l][0]))
                               for l in range(1, layers)]).astype(jnp.bfloat16)
        w_hh_rest = jnp.stack([fold_g(jnp.transpose(params["lstm"][l][1]))
                               for l in range(1, layers)]).astype(jnp.bfloat16)
        b_rest = jnp.stack([fold_g((params["lstm"][l][2] + params["lstm"][l][3])
                                   .reshape(1, 4 * H))
                            for l in range(1, layers)]).astype(jnp.float32)
    else:  # keep operand ranks/sizes valid; never read by the kernel
        w_ih_rest = jnp.zeros((1, H, 4 * H), jnp.bfloat16)
        w_hh_rest = jnp.zeros((1, H, 4 * H), jnp.bfloat16)
        b_rest = jnp.zeros((1, 1, 4 * H), jnp.float32)

    # head: split fc weight; x2 contribution + fc bias folded into a per-row bias
    w_fcT = jnp.transpose(params["w_fc"]).astype(jnp.float32)          # (H+2, mid)
    w_fc_h = w_fcT[:H]                                                 # (H, mid)
    b_head = x2f @ w_fcT[H:] + params["b_fc"].reshape(1, -1)           # (B_pad, mid)
    w_fc1 = jnp.zeros((mid_size, out_pad), jnp.float32).at[:, :out_size].set(
        jnp.transpose(params["w_fc1"]).astype(jnp.float32))
    b_fc1 = jnp.zeros((1, out_pad), jnp.float32).at[:, :out_size].set(
        params["b_fc1"].reshape(1, -1).astype(jnp.float32))

    inputs = [x_tm, lens2d, w_ih0T, w_hh0T, b0,
              w_ih_rest, w_hh_rest, b_rest,
              w_fc_h, b_head, w_fc1, b_fc1]

    def full(a):  # weight operand: same (whole) block for every grid step
        return pl.BlockSpec(a.shape, lambda b, nd=a.ndim: (0,) * nd)

    in_specs = [
        pl.BlockSpec((T, Bt, D), lambda b: (0, b, 0)),        # x, time-major
        pl.BlockSpec((Bt, 1), lambda b: (b, 0)),              # lengths
        full(w_ih0T), full(w_hh0T), full(b0),
        full(w_ih_rest), full(w_hh_rest), full(b_rest),
        full(w_fc_h),
        pl.BlockSpec((Bt, mid_size), lambda b: (b, 0)),       # per-row head bias
        full(w_fc1), full(b_fc1),
    ]

    kernel = make_akirnn_kernel(layers, H, T, Bt)
    out_padded = pl.pallas_call(
        kernel,
        out_shape=jax.ShapeDtypeStruct((B_pad, out_pad), jnp.float32),
        grid=(nb,),
        in_specs=in_specs,
        out_specs=pl.BlockSpec((Bt, out_pad), lambda b: (b, 0)),
        compiler_params=pltpu.CompilerParams(
            dimension_semantics=("parallel",)),   # shard batch tiles over v7x's 2 TCs
    )(*inputs)
    return out_padded[:B, :out_size]


def akirnn_reference(x1_padded, x2, lengths, params):
    """Pure-JAX f32 reference (same packed-sequence semantics)."""
    B, T, D = x1_padded.shape
    layers, H = params["layers"], params["hidden"]
    hs = [jnp.zeros((B, H), jnp.float32) for _ in range(layers)]
    cs = [jnp.zeros((B, H), jnp.float32) for _ in range(layers)]
    lens = lengths.astype(jnp.int32).reshape(B, 1)
    for t in range(T):
        keep = lens > t
        inp = x1_padded[:, t, :]
        for l in range(layers):
            w_ih, w_hh, b_ih, b_hh = params["lstm"][l]
            gates = inp @ w_ih.T + hs[l] @ w_hh.T + b_ih + b_hh
            i = jax.nn.sigmoid(gates[:, :H])
            f = jax.nn.sigmoid(gates[:, H:2 * H])
            g = jnp.tanh(gates[:, 2 * H:3 * H])
            o = jax.nn.sigmoid(gates[:, 3 * H:])
            c_new = f * cs[l] + i * g
            h_new = o * jnp.tanh(c_new)
            hs[l] = jnp.where(keep, h_new, hs[l])
            cs[l] = jnp.where(keep, c_new, cs[l])
            inp = hs[l]
    combined = jnp.concatenate([hs[-1], x2], axis=1)
    mid = combined @ params["w_fc"].T + params["b_fc"]
    mid = jnp.where(mid >= 0, mid, 0.01 * mid)
    return mid @ params["w_fc1"].T + params["b_fc1"]


if __name__ == "__main__":
    # Small shapes consistent with the module.
    input_size, hidden_size, output_size, mid_size, layers = 4, 32, 3, 16, 2
    B, T = 2, 8

    key = jax.random.PRNGKey(0)
    k1, k2, kp = jax.random.split(key, 3)
    x1_padded = jax.random.normal(k1, (B, T, input_size), jnp.float32)
    x2 = jax.random.normal(k2, (B, 2), jnp.float32)
    lengths = jnp.array([T, 5], dtype=jnp.int32)   # variable-length sequences

    params = init_params(kp, input_size, hidden_size, output_size, mid_size, layers)

    out = akirnn_forward(x1_padded, x2, lengths, params)
    jax.block_until_ready(out)
    assert out.shape == (B, output_size)

    # Correctness vs pure-JAX reference (loose tol: recurrence matmuls are bf16).
    ref = akirnn_reference(x1_padded, x2, lengths, params)
    assert jnp.allclose(out, ref, atol=5e-2, rtol=5e-2), (out, ref)

    print("KERNEL_OK")
</pallas_src>

<mosaic_0001>
module attributes {stable_mosaic.version = 11 : i64} {
  func.func @kernel(%arg0: i32, %arg1: memref<8x8x4xbf16, #tpu.memory_space<vmem>>, %arg2: memref<8x1xi32, #tpu.memory_space<vmem>>, %arg3: memref<4x128xbf16, #tpu.memory_space<vmem>>, %arg4: memref<32x128xbf16, #tpu.memory_space<vmem>>, %arg5: memref<1x128xf32, #tpu.memory_space<vmem>>, %arg6: memref<1x32x128xbf16, #tpu.memory_space<vmem>>, %arg7: memref<1x32x128xbf16, #tpu.memory_space<vmem>>, %arg8: memref<1x1x128xf32, #tpu.memory_space<vmem>>, %arg9: memref<32x16xf32, #tpu.memory_space<vmem>>, %arg10: memref<8x16xf32, #tpu.memory_space<vmem>>, %arg11: memref<16x128xf32, #tpu.memory_space<vmem>>, %arg12: memref<1x128xf32, #tpu.memory_space<vmem>>, %arg13: memref<8x128xf32, #tpu.memory_space<vmem>>) attributes {dimension_semantics = [#tpu.dimension_semantics<parallel>], iteration_bounds = array<i64: 1>, scalar_prefetch = 0 : i64, scratch_operands = 0 : i64, tpu.core_type = #tpu.core_type<tc>, window_params = [{transform_indices = @transform_0, window_bounds = array<i64: 8, 8, 4>}, {transform_indices = @transform_1, window_bounds = array<i64: 8, 1>}, {pipeline_mode = #tpu.pipeline_mode<synchronous>, transform_indices = @transform_2, window_bounds = array<i64: 4, 128>}, {pipeline_mode = #tpu.pipeline_mode<synchronous>, transform_indices = @transform_3, window_bounds = array<i64: 32, 128>}, {pipeline_mode = #tpu.pipeline_mode<synchronous>, transform_indices = @transform_4, window_bounds = array<i64: 1, 128>}, {pipeline_mode = #tpu.pipeline_mode<synchronous>, transform_indices = @transform_5, window_bounds = array<i64: 1, 32, 128>}, {pipeline_mode = #tpu.pipeline_mode<synchronous>, transform_indices = @transform_6, window_bounds = array<i64: 1, 32, 128>}, {pipeline_mode = #tpu.pipeline_mode<synchronous>, transform_indices = @transform_7, window_bounds = array<i64: 1, 1, 128>}, {pipeline_mode = #tpu.pipeline_mode<synchronous>, transform_indices = @transform_8, window_bounds = array<i64: 32, 16>}, {transform_indices = @transform_9, window_bounds = array<i64: 8, 16>}, {pipeline_mode = #tpu.pipeline_mode<synchronous>, transform_indices = @transform_10, window_bounds = array<i64: 16, 128>}, {pipeline_mode = #tpu.pipeline_mode<synchronous>, transform_indices = @transform_11, window_bounds = array<i64: 1, 128>}, {transform_indices = @transform_12, window_bounds = array<i64: 8, 128>}]} {
    %c0 = arith.constant 0 : index
    %c0_0 = arith.constant 0 : index
    %0 = vector.load %arg2[%c0, %c0_0] : memref<8x1xi32, #tpu.memory_space<vmem>>, vector<8x1xi32>
    %c0_1 = arith.constant 0 : index
    %c0_2 = arith.constant 0 : index
    %1 = vector.load %arg4[%c0_1, %c0_2] : memref<32x128xbf16, #tpu.memory_space<vmem>>, vector<32x128xbf16>
    %c0_3 = arith.constant 0 : index
    %c0_4 = arith.constant 0 : index
    %c0_5 = arith.constant 0 : index
    %2 = vector.load %arg6[%c0_3, %c0_4, %c0_5] : memref<1x32x128xbf16, #tpu.memory_space<vmem>>, vector<1x32x128xbf16>
    %3 = vector.shape_cast %2 : vector<1x32x128xbf16> to vector<32x128xbf16>
    %c0_6 = arith.constant 0 : index
    %c0_7 = arith.constant 0 : index
    %c0_8 = arith.constant 0 : index
    %4 = vector.load %arg7[%c0_6, %c0_7, %c0_8] : memref<1x32x128xbf16, #tpu.memory_space<vmem>>, vector<1x32x128xbf16>
    %5 = vector.shape_cast %4 : vector<1x32x128xbf16> to vector<32x128xbf16>
    %c0_9 = arith.constant 0 : index
    %c0_10 = arith.constant 0 : index
    %c0_11 = arith.constant 0 : index
    %6 = vector.load %arg8[%c0_9, %c0_10, %c0_11] : memref<1x1x128xf32, #tpu.memory_space<vmem>>, vector<1x1x128xf32>
    %7 = vector.shape_cast %6 : vector<1x1x128xf32> to vector<1x128xf32>
    %8 = tpu.iota {dimensions = array<i32: 1>} : vector<1x128xi32>
    %c64_i32 = arith.constant 64 : i32
    %9 = vector.broadcast %c64_i32 : i32 to vector<1x128xi32>
    %10 = arith.cmpi sge, %8, %9 : vector<1x128xi32>
    %c96_i32 = arith.constant 96 : i32
    %11 = vector.broadcast %c96_i32 : i32 to vector<1x128xi32>
    %12 = arith.cmpi slt, %8, %11 : vector<1x128xi32>
    %13 = arith.andi %10, %12 : vector<1x128xi1>
    %cst = arith.constant 2.000000e+00 : f32
    %cst_12 = arith.constant 1.000000e+00 : f32
    %14 = vector.broadcast %cst : f32 to vector<1x128xf32>
    %15 = vector.broadcast %cst_12 : f32 to vector<1x128xf32>
    %16 = arith.select %13, %14, %15 : vector<1x128xi1>, vector<1x128xf32>
    %cst_13 = arith.constant -1.000000e+00 : f32
    %cst_14 = arith.constant 0.000000e+00 : f32
    %17 = vector.broadcast %cst_13 : f32 to vector<1x128xf32>
    %18 = vector.broadcast %cst_14 : f32 to vector<1x128xf32>
    %19 = arith.select %13, %17, %18 : vector<1x128xi1>, vector<1x128xf32>
    %c0_15 = arith.constant 0 : index
    %c0_16 = arith.constant 0 : index
    %c0_17 = arith.constant 0 : index
    %20 = vector.load %arg1[%c0_15, %c0_16, %c0_17] : memref<8x8x4xbf16, #tpu.memory_space<vmem>>, vector<8x8x4xbf16>
    %21 = vector.shape_cast %20 : vector<8x8x4xbf16> to vector<64x4xbf16>
    %c0_18 = arith.constant 0 : index
    %c0_19 = arith.constant 0 : index
    %22 = vector.load %arg3[%c0_18, %c0_19] : memref<4x128xbf16, #tpu.memory_space<vmem>>, vector<4x128xbf16>
    %cst_20 = arith.constant dense<0.000000e+00> : vector<64x128xf32>
    %23 = tpu.matmul %21, %22, %cst_20 {dimension_numbers = #tpu.dot_dimension_numbers<[1], [0], [0], [1], [0, 0, 1, 1], [], []>} : vector<64x4xbf16>, vector<4x128xbf16>, vector<64x128xf32> -> vector<64x128xf32>
    %c0_21 = arith.constant 0 : index
    %c0_22 = arith.constant 0 : index
    %24 = vector.load %arg5[%c0_21, %c0_22] : memref<1x128xf32, #tpu.memory_space<vmem>>, vector<1x128xf32>
    %25 = vector.broadcast %24 : vector<1x128xf32> to vector<64x128xf32>
    %26 = arith.addf %23, %25 : vector<64x128xf32>
    %27 = vector.shape_cast %26 : vector<64x128xf32> to vector<8x8x128xf32>
    %cst_23 = arith.constant 0.000000e+00 : f32
    %28 = vector.broadcast %cst_23 : f32 to vector<8x32xf32>
    %cst_24 = arith.constant 0.000000e+00 : f32
    %29 = vector.broadcast %cst_24 : f32 to vector<8x32xf32>
    %cst_25 = arith.constant 0.000000e+00 : f32
    %30 = vector.broadcast %cst_25 : f32 to vector<8x32xf32>
    %cst_26 = arith.constant 0.000000e+00 : f32
    %31 = vector.broadcast %cst_26 : f32 to vector<8x32xf32>
    %c0_i32 = arith.constant 0 : i32
    %32 = vector.broadcast %c0_i32 : i32 to vector<8x1xi32>
    %33 = arith.cmpi sgt, %0, %32 : vector<8x1xi32>
    %34 = vector.shape_cast %33 : vector<8x1xi1> to vector<8x1xi1>
    %35 = vector.broadcast %34 : vector<8x1xi1> to vector<8x32xi1>
    %36 = vector.extract_strided_slice %27 {offsets = [0, 0, 0], sizes = [1, 8, 128], strides = [1, 1, 1]} : vector<8x8x128xf32> to vector<1x8x128xf32>
    %37 = vector.shape_cast %36 : vector<1x8x128xf32> to vector<8x128xf32>
    %38 = arith.truncf %28 : vector<8x32xf32> to vector<8x32xbf16>
    %cst_27 = arith.constant dense<0.000000e+00> : vector<8x128xf32>
    %39 = tpu.matmul %38, %1, %cst_27 {dimension_numbers = #tpu.dot_dimension_numbers<[1], [0], [0], [1], [0, 0, 1, 1], [], []>} : vector<8x32xbf16>, vector<32x128xbf16>, vector<8x128xf32> -> vector<8x128xf32>
    %40 = arith.addf %37, %39 : vector<8x128xf32>
    %41 = arith.negf %40 : vector<8x128xf32>
    %42 = math.exp %41 : vector<8x128xf32>
    %cst_28 = arith.constant 1.000000e+00 : f32
    %43 = vector.broadcast %cst_28 : f32 to vector<8x128xf32>
    %44 = arith.addf %43, %42 : vector<8x128xf32>
    %45 = arith.divf %43, %44 : vector<8x128xf32>
    %46 = vector.broadcast %16 : vector<1x128xf32> to vector<8x128xf32>
    %47 = arith.mulf %45, %46 : vector<8x128xf32>
    %48 = vector.broadcast %19 : vector<1x128xf32> to vector<8x128xf32>
    %49 = arith.addf %47, %48 : vector<8x128xf32>
    %50 = vector.extract_strided_slice %49 {offsets = [0, 0], sizes = [8, 32], strides = [1, 1]} : vector<8x128xf32> to vector<8x32xf32>
    %51 = vector.extract_strided_slice %49 {offsets = [0, 32], sizes = [8, 32], strides = [1, 1]} : vector<8x128xf32> to vector<8x32xf32>
    %52 = vector.extract_strided_slice %49 {offsets = [0, 64], sizes = [8, 32], strides = [1, 1]} : vector<8x128xf32> to vector<8x32xf32>
    %53 = vector.extract_strided_slice %49 {offsets = [0, 96], sizes = [8, 32], strides = [1, 1]} : vector<8x128xf32> to vector<8x32xf32>
    %54 = arith.mulf %51, %30 : vector<8x32xf32>
    %55 = arith.mulf %50, %52 : vector<8x32xf32>
    %56 = arith.addf %54, %55 : vector<8x32xf32>
    %57 = math.tanh %56 : vector<8x32xf32>
    %58 = arith.mulf %53, %57 : vector<8x32xf32>
    %59 = arith.select %35, %58, %28 : vector<8x32xi1>, vector<8x32xf32>
    %60 = arith.select %35, %56, %30 : vector<8x32xi1>, vector<8x32xf32>
    %61 = arith.truncf %59 : vector<8x32xf32> to vector<8x32xbf16>
    %cst_29 = arith.constant dense<0.000000e+00> : vector<8x128xf32>
    %62 = tpu.matmul %61, %3, %cst_29 {dimension_numbers = #tpu.dot_dimension_numbers<[1], [0], [0], [1], [0, 0, 1, 1], [], []>} : vector<8x32xbf16>, vector<32x128xbf16>, vector<8x128xf32> -> vector<8x128xf32>
    %63 = arith.truncf %29 : vector<8x32xf32> to vector<8x32xbf16>
    %cst_30 = arith.constant dense<0.000000e+00> : vector<8x128xf32>
    %64 = tpu.matmul %63, %5, %cst_30 {dimension_numbers = #tpu.dot_dimension_numbers<[1], [0], [0], [1], [0, 0, 1, 1], [], []>} : vector<8x32xbf16>, vector<32x128xbf16>, vector<8x128xf32> -> vector<8x128xf32>
    %65 = arith.addf %62, %64 : vector<8x128xf32>
    %66 = vector.broadcast %7 : vector<1x128xf32> to vector<8x128xf32>
    %67 = arith.addf %65, %66 : vector<8x128xf32>
    %68 = arith.negf %67 : vector<8x128xf32>
    %69 = math.exp %68 : vector<8x128xf32>
    %cst_31 = arith.constant 1.000000e+00 : f32
    %70 = vector.broadcast %cst_31 : f32 to vector<8x128xf32>
    %71 = arith.addf %70, %69 : vector<8x128xf32>
    %72 = arith.divf %70, %71 : vector<8x128xf32>
    %73 = vector.broadcast %16 : vector<1x128xf32> to vector<8x128xf32>
    %74 = arith.mulf %72, %73 : vector<8x128xf32>
    %75 = vector.broadcast %19 : vector<1x128xf32> to vector<8x128xf32>
    %76 = arith.addf %74, %75 : vector<8x128xf32>
    %77 = vector.extract_strided_slice %76 {offsets = [0, 0], sizes = [8, 32], strides = [1, 1]} : vector<8x128xf32> to vector<8x32xf32>
    %78 = vector.extract_strided_slice %76 {offsets = [0, 32], sizes = [8, 32], strides = [1, 1]} : vector<8x128xf32> to vector<8x32xf32>
    %79 = vector.extract_strided_slice %76 {offsets = [0, 64], sizes = [8, 32], strides = [1, 1]} : vector<8x128xf32> to vector<8x32xf32>
    %80 = vector.extract_strided_slice %76 {offsets = [0, 96], sizes = [8, 32], strides = [1, 1]} : vector<8x128xf32> to vector<8x32xf32>
    %81 = arith.mulf %78, %31 : vector<8x32xf32>
    %82 = arith.mulf %77, %79 : vector<8x32xf32>
    %83 = arith.addf %81, %82 : vector<8x32xf32>
    %84 = math.tanh %83 : vector<8x32xf32>
    %85 = arith.mulf %80, %84 : vector<8x32xf32>
    %86 = arith.select %35, %85, %29 : vector<8x32xi1>, vector<8x32xf32>
    %87 = arith.select %35, %83, %31 : vector<8x32xi1>, vector<8x32xf32>
    %c1_i32 = arith.constant 1 : i32
    %88 = vector.broadcast %c1_i32 : i32 to vector<8x1xi32>
    %89 = arith.cmpi sgt, %0, %88 : vector<8x1xi32>
    %90 = vector.shape_cast %89 : vector<8x1xi1> to vector<8x1xi1>
    %91 = vector.broadcast %90 : vector<8x1xi1> to vector<8x32xi1>
    %92 = vector.extract_strided_slice %27 {offsets = [1, 0, 0], sizes = [1, 8, 128], strides = [1, 1, 1]} : vector<8x8x128xf32> to vector<1x8x128xf32>
    %93 = vector.shape_cast %92 : vector<1x8x128xf32> to vector<8x128xf32>
    %94 = arith.truncf %59 : vector<8x32xf32> to vector<8x32xbf16>
    %cst_32 = arith.constant dense<0.000000e+00> : vector<8x128xf32>
    %95 = tpu.matmul %94, %1, %cst_32 {dimension_numbers = #tpu.dot_dimension_numbers<[1], [0], [0], [1], [0, 0, 1, 1], [], []>} : vector<8x32xbf16>, vector<32x128xbf16>, vector<8x128xf32> -> vector<8x128xf32>
    %96 = arith.addf %93, %95 : vector<8x128xf32>
    %97 = arith.negf %96 : vector<8x128xf32>
    %98 = math.exp %97 : vector<8x128xf32>
    %cst_33 = arith.constant 1.000000e+00 : f32
    %99 = vector.broadcast %cst_33 : f32 to vector<8x128xf32>
    %100 = arith.addf %99, %98 : vector<8x128xf32>
    %101 = arith.divf %99, %100 : vector<8x128xf32>
    %102 = vector.broadcast %16 : vector<1x128xf32> to vector<8x128xf32>
    %103 = arith.mulf %101, %102 : vector<8x128xf32>
    %104 = vector.broadcast %19 : vector<1x128xf32> to vector<8x128xf32>
    %105 = arith.addf %103, %104 : vector<8x128xf32>
    %106 = vector.extract_strided_slice %105 {offsets = [0, 0], sizes = [8, 32], strides = [1, 1]} : vector<8x128xf32> to vector<8x32xf32>
    %107 = vector.extract_strided_slice %105 {offsets = [0, 32], sizes = [8, 32], strides = [1, 1]} : vector<8x128xf32> to vector<8x32xf32>
    %108 = vector.extract_strided_slice %105 {offsets = [0, 64], sizes = [8, 32], strides = [1, 1]} : vector<8x128xf32> to vector<8x32xf32>
    %109 = vector.extract_strided_slice %105 {offsets = [0, 96], sizes = [8, 32], strides = [1, 1]} : vector<8x128xf32> to vector<8x32xf32>
    %110 = arith.mulf %107, %60 : vector<8x32xf32>
    %111 = arith.mulf %106, %108 : vector<8x32xf32>
    %112 = arith.addf %110, %111 : vector<8x32xf32>
    %113 = math.tanh %112 : vector<8x32xf32>
    %114 = arith.mulf %109, %113 : vector<8x32xf32>
    %115 = arith.select %91, %114, %59 : vector<8x32xi1>, vector<8x32xf32>
    %116 = arith.select %91, %112, %60 : vector<8x32xi1>, vector<8x32xf32>
    %117 = arith.truncf %115 : vector<8x32xf32> to vector<8x32xbf16>
    %cst_34 = arith.constant dense<0.000000e+00> : vector<8x128xf32>
    %118 = tpu.matmul %117, %3, %cst_34 {dimension_numbers = #tpu.dot_dimension_numbers<[1], [0], [0], [1], [0, 0, 1, 1], [], []>} : vector<8x32xbf16>, vector<32x128xbf16>, vector<8x128xf32> -> vector<8x128xf32>
    %119 = arith.truncf %86 : vector<8x32xf32> to vector<8x32xbf16>
    %cst_35 = arith.constant dense<0.000000e+00> : vector<8x128xf32>
    %120 = tpu.matmul %119, %5, %cst_35 {dimension_numbers = #tpu.dot_dimension_numbers<[1], [0], [0], [1], [0, 0, 1, 1], [], []>} : vector<8x32xbf16>, vector<32x128xbf16>, vector<8x128xf32> -> vector<8x128xf32>
    %121 = arith.addf %118, %120 : vector<8x128xf32>
    %122 = vector.broadcast %7 : vector<1x128xf32> to vector<8x128xf32>
    %123 = arith.addf %121, %122 : vector<8x128xf32>
    %124 = arith.negf %123 : vector<8x128xf32>
    %125 = math.exp %124 : vector<8x128xf32>
    %cst_36 = arith.constant 1.000000e+00 : f32
    %126 = vector.broadcast %cst_36 : f32 to vector<8x128xf32>
    %127 = arith.addf %126, %125 : vector<8x128xf32>
    %128 = arith.divf %126, %127 : vector<8x128xf32>
    %129 = vector.broadcast %16 : vector<1x128xf32> to vector<8x128xf32>
    %130 = arith.mulf %128, %129 : vector<8x128xf32>
    %131 = vector.broadcast %19 : vector<1x128xf32> to vector<8x128xf32>
    %132 = arith.addf %130, %131 : vector<8x128xf32>
    %133 = vector.extract_strided_slice %132 {offsets = [0, 0], sizes = [8, 32], strides = [1, 1]} : vector<8x128xf32> to vector<8x32xf32>
    %134 = vector.extract_strided_slice %132 {offsets = [0, 32], sizes = [8, 32], strides = [1, 1]} : vector<8x128xf32> to vector<8x32xf32>
    %135 = vector.extract_strided_slice %132 {offsets = [0, 64], sizes = [8, 32], strides = [1, 1]} : vector<8x128xf32> to vector<8x32xf32>
    %136 = vector.extract_strided_slice %132 {offsets = [0, 96], sizes = [8, 32], strides = [1, 1]} : vector<8x128xf32> to vector<8x32xf32>
    %137 = arith.mulf %134, %87 : vector<8x32xf32>
    %138 = arith.mulf %133, %135 : vector<8x32xf32>
    %139 = arith.addf %137, %138 : vector<8x32xf32>
    %140 = math.tanh %139 : vector<8x32xf32>
    %141 = arith.mulf %136, %140 : vector<8x32xf32>
    %142 = arith.select %91, %141, %86 : vector<8x32xi1>, vector<8x32xf32>
    %143 = arith.select %91, %139, %87 : vector<8x32xi1>, vector<8x32xf32>
    %c2_i32 = arith.constant 2 : i32
    %144 = vector.broadcast %c2_i32 : i32 to vector<8x1xi32>
    %145 = arith.cmpi sgt, %0, %144 : vector<8x1xi32>
    %146 = vector.shape_cast %145 : vector<8x1xi1> to vector<8x1xi1>
    %147 = vector.broadcast %146 : vector<8x1xi1> to vector<8x32xi1>
    %148 = vector.extract_strided_slice %27 {offsets = [2, 0, 0], sizes = [1, 8, 128], strides = [1, 1, 1]} : vector<8x8x128xf32> to vector<1x8x128xf32>
    %149 = vector.shape_cast %148 : vector<1x8x128xf32> to vector<8x128xf32>
    %150 = arith.truncf %115 : vector<8x32xf32> to vector<8x32xbf16>
    %cst_37 = arith.constant dense<0.000000e+00> : vector<8x128xf32>
    %151 = tpu.matmul %150, %1, %cst_37 {dimension_numbers = #tpu.dot_dimension_numbers<[1], [0], [0], [1], [0, 0, 1, 1], [], []>} : vector<8x32xbf16>, vector<32x128xbf16>, vector<8x128xf32> -> vector<8x128xf32>
    %152 = arith.addf %149, %151 : vector<8x128xf32>
    %153 = arith.negf %152 : vector<8x128xf32>
    %154 = math.exp %153 : vector<8x128xf32>
    %cst_38 = arith.constant 1.000000e+00 : f32
    %155 = vector.broadcast %cst_38 : f32 to vector<8x128xf32>
    %156 = arith.addf %155, %154 : vector<8x128xf32>
    %157 = arith.divf %155, %156 : vector<8x128xf32>
    %158 = vector.broadcast %16 : vector<1x128xf32> to vector<8x128xf32>
    %159 = arith.mulf %157, %158 : vector<8x128xf32>
    %160 = vector.broadcast %19 : vector<1x128xf32> to vector<8x128xf32>
    %161 = arith.addf %159, %160 : vector<8x128xf32>
    %162 = vector.extract_strided_slice %161 {offsets = [0, 0], sizes = [8, 32], strides = [1, 1]} : vector<8x128xf32> to vector<8x32xf32>
    %163 = vector.extract_strided_slice %161 {offsets = [0, 32], sizes = [8, 32], strides = [1, 1]} : vector<8x128xf32> to vector<8x32xf32>
    %164 = vector.extract_strided_slice %161 {offsets = [0, 64], sizes = [8, 32], strides = [1, 1]} : vector<8x128xf32> to vector<8x32xf32>
    %165 = vector.extract_strided_slice %161 {offsets = [0, 96], sizes = [8, 32], strides = [1, 1]} : vector<8x128xf32> to vector<8x32xf32>
    %166 = arith.mulf %163, %116 : vector<8x32xf32>
    %167 = arith.mulf %162, %164 : vector<8x32xf32>
    %168 = arith.addf %166, %167 : vector<8x32xf32>
    %169 = math.tanh %168 : vector<8x32xf32>
    %170 = arith.mulf %165, %169 : vector<8x32xf32>
    %171 = arith.select %147, %170, %115 : vector<8x32xi1>, vector<8x32xf32>
    %172 = arith.select %147, %168, %116 : vector<8x32xi1>, vector<8x32xf32>
    %173 = arith.truncf %171 : vector<8x32xf32> to vector<8x32xbf16>
    %cst_39 = arith.constant dense<0.000000e+00> : vector<8x128xf32>
    %174 = tpu.matmul %173, %3, %cst_39 {dimension_numbers = #tpu.dot_dimension_numbers<[1], [0], [0], [1], [0, 0, 1, 1], [], []>} : vector<8x32xbf16>, vector<32x128xbf16>, vector<8x128xf32> -> vector<8x128xf32>
    %175 = arith.truncf %142 : vector<8x32xf32> to vector<8x32xbf16>
    %cst_40 = arith.constant dense<0.000000e+00> : vector<8x128xf32>
    %176 = tpu.matmul %175, %5, %cst_40 {dimension_numbers = #tpu.dot_dimension_numbers<[1], [0], [0], [1], [0, 0, 1, 1], [], []>} : vector<8x32xbf16>, vector<32x128xbf16>, vector<8x128xf32> -> vector<8x128xf32>
    %177 = arith.addf %174, %176 : vector<8x128xf32>
    %178 = vector.broadcast %7 : vector<1x128xf32> to vector<8x128xf32>
    %179 = arith.addf %177, %178 : vector<8x128xf32>
    %180 = arith.negf %179 : vector<8x128xf32>
    %181 = math.exp %180 : vector<8x128xf32>
    %cst_41 = arith.constant 1.000000e+00 : f32
    %182 = vector.broadcast %cst_41 : f32 to vector<8x128xf32>
    %183 = arith.addf %182, %181 : vector<8x128xf32>
    %184 = arith.divf %182, %183 : vector<8x128xf32>
    %185 = vector.broadcast %16 : vector<1x128xf32> to vector<8x128xf32>
    %186 = arith.mulf %184, %185 : vector<8x128xf32>
    %187 = vector.broadcast %19 : vector<1x128xf32> to vector<8x128xf32>
    %188 = arith.addf %186, %187 : vector<8x128xf32>
    %189 = vector.extract_strided_slice %188 {offsets = [0, 0], sizes = [8, 32], strides = [1, 1]} : vector<8x128xf32> to vector<8x32xf32>
    %190 = vector.extract_strided_slice %188 {offsets = [0, 32], sizes = [8, 32], strides = [1, 1]} : vector<8x128xf32> to vector<8x32xf32>
    %191 = vector.extract_strided_slice %188 {offsets = [0, 64], sizes = [8, 32], strides = [1, 1]} : vector<8x128xf32> to vector<8x32xf32>
    %192 = vector.extract_strided_slice %188 {offsets = [0, 96], sizes = [8, 32], strides = [1, 1]} : vector<8x128xf32> to vector<8x32xf32>
    %193 = arith.mulf %190, %143 : vector<8x32xf32>
    %194 = arith.mulf %189, %191 : vector<8x32xf32>
    %195 = arith.addf %193, %194 : vector<8x32xf32>
    %196 = math.tanh %195 : vector<8x32xf32>
    %197 = arith.mulf %192, %196 : vector<8x32xf32>
    %198 = arith.select %147, %197, %142 : vector<8x32xi1>, vector<8x32xf32>
    %199 = arith.select %147, %195, %143 : vector<8x32xi1>, vector<8x32xf32>
    %c3_i32 = arith.constant 3 : i32
    %200 = vector.broadcast %c3_i32 : i32 to vector<8x1xi32>
    %201 = arith.cmpi sgt, %0, %200 : vector<8x1xi32>
    %202 = vector.shape_cast %201 : vector<8x1xi1> to vector<8x1xi1>
    %203 = vector.broadcast %202 : vector<8x1xi1> to vector<8x32xi1>
    %204 = vector.extract_strided_slice %27 {offsets = [3, 0, 0], sizes = [1, 8, 128], strides = [1, 1, 1]} : vector<8x8x128xf32> to vector<1x8x128xf32>
    %205 = vector.shape_cast %204 : vector<1x8x128xf32> to vector<8x128xf32>
    %206 = arith.truncf %171 : vector<8x32xf32> to vector<8x32xbf16>
    %cst_42 = arith.constant dense<0.000000e+00> : vector<8x128xf32>
    %207 = tpu.matmul %206, %1, %cst_42 {dimension_numbers = #tpu.dot_dimension_numbers<[1], [0], [0], [1], [0, 0, 1, 1], [], []>} : vector<8x32xbf16>, vector<32x128xbf16>, vector<8x128xf32> -> vector<8x128xf32>
    %208 = arith.addf %205, %207 : vector<8x128xf32>
    %209 = arith.negf %208 : vector<8x128xf32>
    %210 = math.exp %209 : vector<8x128xf32>
    %cst_43 = arith.constant 1.000000e+00 : f32
    %211 = vector.broadcast %cst_43 : f32 to vector<8x128xf32>
    %212 = arith.addf %211, %210 : vector<8x128xf32>
    %213 = arith.divf %211, %212 : vector<8x128xf32>
    %214 = vector.broadcast %16 : vector<1x128xf32> to vector<8x128xf32>
    %215 = arith.mulf %213, %214 : vector<8x128xf32>
    %216 = vector.broadcast %19 : vector<1x128xf32> to vector<8x128xf32>
    %217 = arith.addf %215, %216 : vector<8x128xf32>
    %218 = vector.extract_strided_slice %217 {offsets = [0, 0], sizes = [8, 32], strides = [1, 1]} : vector<8x128xf32> to vector<8x32xf32>
    %219 = vector.extract_strided_slice %217 {offsets = [0, 32], sizes = [8, 32], strides = [1, 1]} : vector<8x128xf32> to vector<8x32xf32>
    %220 = vector.extract_strided_slice %217 {offsets = [0, 64], sizes = [8, 32], strides = [1, 1]} : vector<8x128xf32> to vector<8x32xf32>
    %221 = vector.extract_strided_slice %217 {offsets = [0, 96], sizes = [8, 32], strides = [1, 1]} : vector<8x128xf32> to vector<8x32xf32>
    %222 = arith.mulf %219, %172 : vector<8x32xf32>
    %223 = arith.mulf %218, %220 : vector<8x32xf32>
    %224 = arith.addf %222, %223 : vector<8x32xf32>
    %225 = math.tanh %224 : vector<8x32xf32>
    %226 = arith.mulf %221, %225 : vector<8x32xf32>
    %227 = arith.select %203, %226, %171 : vector<8x32xi1>, vector<8x32xf32>
    %228 = arith.select %203, %224, %172 : vector<8x32xi1>, vector<8x32xf32>
    %229 = arith.truncf %227 : vector<8x32xf32> to vector<8x32xbf16>
    %cst_44 = arith.constant dense<0.000000e+00> : vector<8x128xf32>
    %230 = tpu.matmul %229, %3, %cst_44 {dimension_numbers = #tpu.dot_dimension_numbers<[1], [0], [0], [1], [0, 0, 1, 1], [], []>} : vector<8x32xbf16>, vector<32x128xbf16>, vector<8x128xf32> -> vector<8x128xf32>
    %231 = arith.truncf %198 : vector<8x32xf32> to vector<8x32xbf16>
    %cst_45 = arith.constant dense<0.000000e+00> : vector<8x128xf32>
    %232 = tpu.matmul %231, %5, %cst_45 {dimension_numbers = #tpu.dot_dimension_numbers<[1], [0], [0], [1], [0, 0, 1, 1], [], []>} : vector<8x32xbf16>, vector<32x128xbf16>, vector<8x128xf32> -> vector<8x128xf32>
    %233 = arith.addf %230, %232 : vector<8x128xf32>
    %234 = vector.broadcast %7 : vector<1x128xf32> to vector<8x128xf32>
    %235 = arith.addf %233, %234 : vector<8x128xf32>
    %236 = arith.negf %235 : vector<8x128xf32>
    %237 = math.exp %236 : vector<8x128xf32>
    %cst_46 = arith.constant 1.000000e+00 : f32
    %238 = vector.broadcast %cst_46 : f32 to vector<8x128xf32>
    %239 = arith.addf %238, %237 : vector<8x128xf32>
    %240 = arith.divf %238, %239 : vector<8x128xf32>
    %241 = vector.broadcast %16 : vector<1x128xf32> to vector<8x128xf32>
    %242 = arith.mulf %240, %241 : vector<8x128xf32>
    %243 = vector.broadcast %19 : vector<1x128xf32> to vector<8x128xf32>
    %244 = arith.addf %242, %243 : vector<8x128xf32>
    %245 = vector.extract_strided_slice %244 {offsets = [0, 0], sizes = [8, 32], strides = [1, 1]} : vector<8x128xf32> to vector<8x32xf32>
    %246 = vector.extract_strided_slice %244 {offsets = [0, 32], sizes = [8, 32], strides = [1, 1]} : vector<8x128xf32> to vector<8x32xf32>
    %247 = vector.extract_strided_slice %244 {offsets = [0, 64], sizes = [8, 32], strides = [1, 1]} : vector<8x128xf32> to vector<8x32xf32>
    %248 = vector.extract_strided_slice %244 {offsets = [0, 96], sizes = [8, 32], strides = [1, 1]} : vector<8x128xf32> to vector<8x32xf32>
    %249 = arith.mulf %246, %199 : vector<8x32xf32>
    %250 = arith.mulf %245, %247 : vector<8x32xf32>
    %251 = arith.addf %249, %250 : vector<8x32xf32>
    %252 = math.tanh %251 : vector<8x32xf32>
    %253 = arith.mulf %248, %252 : vector<8x32xf32>
    %254 = arith.select %203, %253, %198 : vector<8x32xi1>, vector<8x32xf32>
    %255 = arith.select %203, %251, %199 : vector<8x32xi1>, vector<8x32xf32>
    %c4_i32 = arith.constant 4 : i32
    %256 = vector.broadcast %c4_i32 : i32 to vector<8x1xi32>
    %257 = arith.cmpi sgt, %0, %256 : vector<8x1xi32>
    %258 = vector.shape_cast %257 : vector<8x1xi1> to vector<8x1xi1>
    %259 = vector.broadcast %258 : vector<8x1xi1> to vector<8x32xi1>
    %260 = vector.extract_strided_slice %27 {offsets = [4, 0, 0], sizes = [1, 8, 128], strides = [1, 1, 1]} : vector<8x8x128xf32> to vector<1x8x128xf32>
    %261 = vector.shape_cast %260 : vector<1x8x128xf32> to vector<8x128xf32>
    %262 = arith.truncf %227 : vector<8x32xf32> to vector<8x32xbf16>
    %cst_47 = arith.constant dense<0.000000e+00> : vector<8x128xf32>
    %263 = tpu.matmul %262, %1, %cst_47 {dimension_numbers = #tpu.dot_dimension_numbers<[1], [0], [0], [1], [0, 0, 1, 1], [], []>} : vector<8x32xbf16>, vector<32x128xbf16>, vector<8x128xf32> -> vector<8x128xf32>
    %264 = arith.addf %261, %263 : vector<8x128xf32>
    %265 = arith.negf %264 : vector<8x128xf32>
    %266 = math.exp %265 : vector<8x128xf32>
    %cst_48 = arith.constant 1.000000e+00 : f32
    %267 = vector.broadcast %cst_48 : f32 to vector<8x128xf32>
    %268 = arith.addf %267, %266 : vector<8x128xf32>
    %269 = arith.divf %267, %268 : vector<8x128xf32>
    %270 = vector.broadcast %16 : vector<1x128xf32> to vector<8x128xf32>
    %271 = arith.mulf %269, %270 : vector<8x128xf32>
    %272 = vector.broadcast %19 : vector<1x128xf32> to vector<8x128xf32>
    %273 = arith.addf %271, %272 : vector<8x128xf32>
    %274 = vector.extract_strided_slice %273 {offsets = [0, 0], sizes = [8, 32], strides = [1, 1]} : vector<8x128xf32> to vector<8x32xf32>
    %275 = vector.extract_strided_slice %273 {offsets = [0, 32], sizes = [8, 32], strides = [1, 1]} : vector<8x128xf32> to vector<8x32xf32>
    %276 = vector.extract_strided_slice %273 {offsets = [0, 64], sizes = [8, 32], strides = [1, 1]} : vector<8x128xf32> to vector<8x32xf32>
    %277 = vector.extract_strided_slice %273 {offsets = [0, 96], sizes = [8, 32], strides = [1, 1]} : vector<8x128xf32> to vector<8x32xf32>
    %278 = arith.mulf %275, %228 : vector<8x32xf32>
    %279 = arith.mulf %274, %276 : vector<8x32xf32>
    %280 = arith.addf %278, %279 : vector<8x32xf32>
    %281 = math.tanh %280 : vector<8x32xf32>
    %282 = arith.mulf %277, %281 : vector<8x32xf32>
    %283 = arith.select %259, %282, %227 : vector<8x32xi1>, vector<8x32xf32>
    %284 = arith.select %259, %280, %228 : vector<8x32xi1>, vector<8x32xf32>
    %285 = arith.truncf %283 : vector<8x32xf32> to vector<8x32xbf16>
    %cst_49 = arith.constant dense<0.000000e+00> : vector<8x128xf32>
    %286 = tpu.matmul %285, %3, %cst_49 {dimension_numbers = #tpu.dot_dimension_numbers<[1], [0], [0], [1], [0, 0, 1, 1], [], []>} : vector<8x32xbf16>, vector<32x128xbf16>, vector<8x128xf32> -> vector<8x128xf32>
    %287 = arith.truncf %254 : vector<8x32xf32> to vector<8x32xbf16>
    %cst_50 = arith.constant dense<0.000000e+00> : vector<8x128xf32>
    %288 = tpu.matmul %287, %5, %cst_50 {dimension_numbers = #tpu.dot_dimension_numbers<[1], [0], [0], [1], [0, 0, 1, 1], [], []>} : vector<8x32xbf16>, vector<32x128xbf16>, vector<8x128xf32> -> vector<8x128xf32>
    %289 = arith.addf %286, %288 : vector<8x128xf32>
    %290 = vector.broadcast %7 : vector<1x128xf32> to vector<8x128xf32>
    %291 = arith.addf %289, %290 : vector<8x128xf32>
    %292 = arith.negf %291 : vector<8x128xf32>
    %293 = math.exp %292 : vector<8x128xf32>
    %cst_51 = arith.constant 1.000000e+00 : f32
    %294 = vector.broadcast %cst_51 : f32 to vector<8x128xf32>
    %295 = arith.addf %294, %293 : vector<8x128xf32>
    %296 = arith.divf %294, %295 : vector<8x128xf32>
    %297 = vector.broadcast %16 : vector<1x128xf32> to vector<8x128xf32>
    %298 = arith.mulf %296, %297 : vector<8x128xf32>
    %299 = vector.broadcast %19 : vector<1x128xf32> to vector<8x128xf32>
    %300 = arith.addf %298, %299 : vector<8x128xf32>
    %301 = vector.extract_strided_slice %300 {offsets = [0, 0], sizes = [8, 32], strides = [1, 1]} : vector<8x128xf32> to vector<8x32xf32>
    %302 = vector.extract_strided_slice %300 {offsets = [0, 32], sizes = [8, 32], strides = [1, 1]} : vector<8x128xf32> to vector<8x32xf32>
    %303 = vector.extract_strided_slice %300 {offsets = [0, 64], sizes = [8, 32], strides = [1, 1]} : vector<8x128xf32> to vector<8x32xf32>
    %304 = vector.extract_strided_slice %300 {offsets = [0, 96], sizes = [8, 32], strides = [1, 1]} : vector<8x128xf32> to vector<8x32xf32>
    %305 = arith.mulf %302, %255 : vector<8x32xf32>
    %306 = arith.mulf %301, %303 : vector<8x32xf32>
    %307 = arith.addf %305, %306 : vector<8x32xf32>
    %308 = math.tanh %307 : vector<8x32xf32>
    %309 = arith.mulf %304, %308 : vector<8x32xf32>
    %310 = arith.select %259, %309, %254 : vector<8x32xi1>, vector<8x32xf32>
    %311 = arith.select %259, %307, %255 : vector<8x32xi1>, vector<8x32xf32>
    %c5_i32 = arith.constant 5 : i32
    %312 = vector.broadcast %c5_i32 : i32 to vector<8x1xi32>
    %313 = arith.cmpi sgt, %0, %312 : vector<8x1xi32>
    %314 = vector.shape_cast %313 : vector<8x1xi1> to vector<8x1xi1>
    %315 = vector.broadcast %314 : vector<8x1xi1> to vector<8x32xi1>
    %316 = vector.extract_strided_slice %27 {offsets = [5, 0, 0], sizes = [1, 8, 128], strides = [1, 1, 1]} : vector<8x8x128xf32> to vector<1x8x128xf32>
    %317 = vector.shape_cast %316 : vector<1x8x128xf32> to vector<8x128xf32>
    %318 = arith.truncf %283 : vector<8x32xf32> to vector<8x32xbf16>
    %cst_52 = arith.constant dense<0.000000e+00> : vector<8x128xf32>
    %319 = tpu.matmul %318, %1, %cst_52 {dimension_numbers = #tpu.dot_dimension_numbers<[1], [0], [0], [1], [0, 0, 1, 1], [], []>} : vector<8x32xbf16>, vector<32x128xbf16>, vector<8x128xf32> -> vector<8x128xf32>
    %320 = arith.addf %317, %319 : vector<8x128xf32>
    %321 = arith.negf %320 : vector<8x128xf32>
    %322 = math.exp %321 : vector<8x128xf32>
    %cst_53 = arith.constant 1.000000e+00 : f32
    %323 = vector.broadcast %cst_53 : f32 to vector<8x128xf32>
    %324 = arith.addf %323, %322 : vector<8x128xf32>
    %325 = arith.divf %323, %324 : vector<8x128xf32>
    %326 = vector.broadcast %16 : vector<1x128xf32> to vector<8x128xf32>
    %327 = arith.mulf %325, %326 : vector<8x128xf32>
    %328 = vector.broadcast %19 : vector<1x128xf32> to vector<8x128xf32>
    %329 = arith.addf %327, %328 : vector<8x128xf32>
    %330 = vector.extract_strided_slice %329 {offsets = [0, 0], sizes = [8, 32], strides = [1, 1]} : vector<8x128xf32> to vector<8x32xf32>
    %331 = vector.extract_strided_slice %329 {offsets = [0, 32], sizes = [8, 32], strides = [1, 1]} : vector<8x128xf32> to vector<8x32xf32>
    %332 = vector.extract_strided_slice %329 {offsets = [0, 64], sizes = [8, 32], strides = [1, 1]} : vector<8x128xf32> to vector<8x32xf32>
    %333 = vector.extract_strided_slice %329 {offsets = [0, 96], sizes = [8, 32], strides = [1, 1]} : vector<8x128xf32> to vector<8x32xf32>
    %334 = arith.mulf %331, %284 : vector<8x32xf32>
    %335 = arith.mulf %330, %332 : vector<8x32xf32>
    %336 = arith.addf %334, %335 : vector<8x32xf32>
    %337 = math.tanh %336 : vector<8x32xf32>
    %338 = arith.mulf %333, %337 : vector<8x32xf32>
    %339 = arith.select %315, %338, %283 : vector<8x32xi1>, vector<8x32xf32>
    %340 = arith.select %315, %336, %284 : vector<8x32xi1>, vector<8x32xf32>
    %341 = arith.truncf %339 : vector<8x32xf32> to vector<8x32xbf16>
    %cst_54 = arith.constant dense<0.000000e+00> : vector<8x128xf32>
    %342 = tpu.matmul %341, %3, %cst_54 {dimension_numbers = #tpu.dot_dimension_numbers<[1], [0], [0], [1], [0, 0, 1, 1], [], []>} : vector<8x32xbf16>, vector<32x128xbf16>, vector<8x128xf32> -> vector<8x128xf32>
    %343 = arith.truncf %310 : vector<8x32xf32> to vector<8x32xbf16>
    %cst_55 = arith.constant dense<0.000000e+00> : vector<8x128xf32>
    %344 = tpu.matmul %343, %5, %cst_55 {dimension_numbers = #tpu.dot_dimension_numbers<[1], [0], [0], [1], [0, 0, 1, 1], [], []>} : vector<8x32xbf16>, vector<32x128xbf16>, vector<8x128xf32> -> vector<8x128xf32>
    %345 = arith.addf %342, %344 : vector<8x128xf32>
    %346 = vector.broadcast %7 : vector<1x128xf32> to vector<8x128xf32>
    %347 = arith.addf %345, %346 : vector<8x128xf32>
    %348 = arith.negf %347 : vector<8x128xf32>
    %349 = math.exp %348 : vector<8x128xf32>
    %cst_56 = arith.constant 1.000000e+00 : f32
    %350 = vector.broadcast %cst_56 : f32 to vector<8x128xf32>
    %351 = arith.addf %350, %349 : vector<8x128xf32>
    %352 = arith.divf %350, %351 : vector<8x128xf32>
    %353 = vector.broadcast %16 : vector<1x128xf32> to vector<8x128xf32>
    %354 = arith.mulf %352, %353 : vector<8x128xf32>
    %355 = vector.broadcast %19 : vector<1x128xf32> to vector<8x128xf32>
    %356 = arith.addf %354, %355 : vector<8x128xf32>
    %357 = vector.extract_strided_slice %356 {offsets = [0, 0], sizes = [8, 32], strides = [1, 1]} : vector<8x128xf32> to vector<8x32xf32>
    %358 = vector.extract_strided_slice %356 {offsets = [0, 32], sizes = [8, 32], strides = [1, 1]} : vector<8x128xf32> to vector<8x32xf32>
    %359 = vector.extract_strided_slice %356 {offsets = [0, 64], sizes = [8, 32], strides = [1, 1]} : vector<8x128xf32> to vector<8x32xf32>
    %360 = vector.extract_strided_slice %356 {offsets = [0, 96], sizes = [8, 32], strides = [1, 1]} : vector<8x128xf32> to vector<8x32xf32>
    %361 = arith.mulf %358, %311 : vector<8x32xf32>
    %362 = arith.mulf %357, %359 : vector<8x32xf32>
    %363 = arith.addf %361, %362 : vector<8x32xf32>
    %364 = math.tanh %363 : vector<8x32xf32>
    %365 = arith.mulf %360, %364 : vector<8x32xf32>
    %366 = arith.select %315, %365, %310 : vector<8x32xi1>, vector<8x32xf32>
    %367 = arith.select %315, %363, %311 : vector<8x32xi1>, vector<8x32xf32>
    %c6_i32 = arith.constant 6 : i32
    %368 = vector.broadcast %c6_i32 : i32 to vector<8x1xi32>
    %369 = arith.cmpi sgt, %0, %368 : vector<8x1xi32>
    %370 = vector.shape_cast %369 : vector<8x1xi1> to vector<8x1xi1>
    %371 = vector.broadcast %370 : vector<8x1xi1> to vector<8x32xi1>
    %372 = vector.extract_strided_slice %27 {offsets = [6, 0, 0], sizes = [1, 8, 128], strides = [1, 1, 1]} : vector<8x8x128xf32> to vector<1x8x128xf32>
    %373 = vector.shape_cast %372 : vector<1x8x128xf32> to vector<8x128xf32>
    %374 = arith.truncf %339 : vector<8x32xf32> to vector<8x32xbf16>
    %cst_57 = arith.constant dense<0.000000e+00> : vector<8x128xf32>
    %375 = tpu.matmul %374, %1, %cst_57 {dimension_numbers = #tpu.dot_dimension_numbers<[1], [0], [0], [1], [0, 0, 1, 1], [], []>} : vector<8x32xbf16>, vector<32x128xbf16>, vector<8x128xf32> -> vector<8x128xf32>
    %376 = arith.addf %373, %375 : vector<8x128xf32>
    %377 = arith.negf %376 : vector<8x128xf32>
    %378 = math.exp %377 : vector<8x128xf32>
    %cst_58 = arith.constant 1.000000e+00 : f32
    %379 = vector.broadcast %cst_58 : f32 to vector<8x128xf32>
    %380 = arith.addf %379, %378 : vector<8x128xf32>
    %381 = arith.divf %379, %380 : vector<8x128xf32>
    %382 = vector.broadcast %16 : vector<1x128xf32> to vector<8x128xf32>
    %383 = arith.mulf %381, %382 : vector<8x128xf32>
    %384 = vector.broadcast %19 : vector<1x128xf32> to vector<8x128xf32>
    %385 = arith.addf %383, %384 : vector<8x128xf32>
    %386 = vector.extract_strided_slice %385 {offsets = [0, 0], sizes = [8, 32], strides = [1, 1]} : vector<8x128xf32> to vector<8x32xf32>
    %387 = vector.extract_strided_slice %385 {offsets = [0, 32], sizes = [8, 32], strides = [1, 1]} : vector<8x128xf32> to vector<8x32xf32>
    %388 = vector.extract_strided_slice %385 {offsets = [0, 64], sizes = [8, 32], strides = [1, 1]} : vector<8x128xf32> to vector<8x32xf32>
    %389 = vector.extract_strided_slice %385 {offsets = [0, 96], sizes = [8, 32], strides = [1, 1]} : vector<8x128xf32> to vector<8x32xf32>
    %390 = arith.mulf %387, %340 : vector<8x32xf32>
    %391 = arith.mulf %386, %388 : vector<8x32xf32>
    %392 = arith.addf %390, %391 : vector<8x32xf32>
    %393 = math.tanh %392 : vector<8x32xf32>
    %394 = arith.mulf %389, %393 : vector<8x32xf32>
    %395 = arith.select %371, %394, %339 : vector<8x32xi1>, vector<8x32xf32>
    %396 = arith.select %371, %392, %340 : vector<8x32xi1>, vector<8x32xf32>
    %397 = arith.truncf %395 : vector<8x32xf32> to vector<8x32xbf16>
    %cst_59 = arith.constant dense<0.000000e+00> : vector<8x128xf32>
    %398 = tpu.matmul %397, %3, %cst_59 {dimension_numbers = #tpu.dot_dimension_numbers<[1], [0], [0], [1], [0, 0, 1, 1], [], []>} : vector<8x32xbf16>, vector<32x128xbf16>, vector<8x128xf32> -> vector<8x128xf32>
    %399 = arith.truncf %366 : vector<8x32xf32> to vector<8x32xbf16>
    %cst_60 = arith.constant dense<0.000000e+00> : vector<8x128xf32>
    %400 = tpu.matmul %399, %5, %cst_60 {dimension_numbers = #tpu.dot_dimension_numbers<[1], [0], [0], [1], [0, 0, 1, 1], [], []>} : vector<8x32xbf16>, vector<32x128xbf16>, vector<8x128xf32> -> vector<8x128xf32>
    %401 = arith.addf %398, %400 : vector<8x128xf32>
    %402 = vector.broadcast %7 : vector<1x128xf32> to vector<8x128xf32>
    %403 = arith.addf %401, %402 : vector<8x128xf32>
    %404 = arith.negf %403 : vector<8x128xf32>
    %405 = math.exp %404 : vector<8x128xf32>
    %cst_61 = arith.constant 1.000000e+00 : f32
    %406 = vector.broadcast %cst_61 : f32 to vector<8x128xf32>
    %407 = arith.addf %406, %405 : vector<8x128xf32>
    %408 = arith.divf %406, %407 : vector<8x128xf32>
    %409 = vector.broadcast %16 : vector<1x128xf32> to vector<8x128xf32>
    %410 = arith.mulf %408, %409 : vector<8x128xf32>
    %411 = vector.broadcast %19 : vector<1x128xf32> to vector<8x128xf32>
    %412 = arith.addf %410, %411 : vector<8x128xf32>
    %413 = vector.extract_strided_slice %412 {offsets = [0, 0], sizes = [8, 32], strides = [1, 1]} : vector<8x128xf32> to vector<8x32xf32>
    %414 = vector.extract_strided_slice %412 {offsets = [0, 32], sizes = [8, 32], strides = [1, 1]} : vector<8x128xf32> to vector<8x32xf32>
    %415 = vector.extract_strided_slice %412 {offsets = [0, 64], sizes = [8, 32], strides = [1, 1]} : vector<8x128xf32> to vector<8x32xf32>
    %416 = vector.extract_strided_slice %412 {offsets = [0, 96], sizes = [8, 32], strides = [1, 1]} : vector<8x128xf32> to vector<8x32xf32>
    %417 = arith.mulf %414, %367 : vector<8x32xf32>
    %418 = arith.mulf %413, %415 : vector<8x32xf32>
    %419 = arith.addf %417, %418 : vector<8x32xf32>
    %420 = math.tanh %419 : vector<8x32xf32>
    %421 = arith.mulf %416, %420 : vector<8x32xf32>
    %422 = arith.select %371, %421, %366 : vector<8x32xi1>, vector<8x32xf32>
    %423 = arith.select %371, %419, %367 : vector<8x32xi1>, vector<8x32xf32>
    %c7_i32 = arith.constant 7 : i32
    %424 = vector.broadcast %c7_i32 : i32 to vector<8x1xi32>
    %425 = arith.cmpi sgt, %0, %424 : vector<8x1xi32>
    %426 = vector.shape_cast %425 : vector<8x1xi1> to vector<8x1xi1>
    %427 = vector.broadcast %426 : vector<8x1xi1> to vector<8x32xi1>
    %428 = vector.extract_strided_slice %27 {offsets = [7, 0, 0], sizes = [1, 8, 128], strides = [1, 1, 1]} : vector<8x8x128xf32> to vector<1x8x128xf32>
    %429 = vector.shape_cast %428 : vector<1x8x128xf32> to vector<8x128xf32>
    %430 = arith.truncf %395 : vector<8x32xf32> to vector<8x32xbf16>
    %cst_62 = arith.constant dense<0.000000e+00> : vector<8x128xf32>
    %431 = tpu.matmul %430, %1, %cst_62 {dimension_numbers = #tpu.dot_dimension_numbers<[1], [0], [0], [1], [0, 0, 1, 1], [], []>} : vector<8x32xbf16>, vector<32x128xbf16>, vector<8x128xf32> -> vector<8x128xf32>
    %432 = arith.addf %429, %431 : vector<8x128xf32>
    %433 = arith.negf %432 : vector<8x128xf32>
    %434 = math.exp %433 : vector<8x128xf32>
    %cst_63 = arith.constant 1.000000e+00 : f32
    %435 = vector.broadcast %cst_63 : f32 to vector<8x128xf32>
    %436 = arith.addf %435, %434 : vector<8x128xf32>
    %437 = arith.divf %435, %436 : vector<8x128xf32>
    %438 = vector.broadcast %16 : vector<1x128xf32> to vector<8x128xf32>
    %439 = arith.mulf %437, %438 : vector<8x128xf32>
    %440 = vector.broadcast %19 : vector<1x128xf32> to vector<8x128xf32>
    %441 = arith.addf %439, %440 : vector<8x128xf32>
    %442 = vector.extract_strided_slice %441 {offsets = [0, 0], sizes = [8, 32], strides = [1, 1]} : vector<8x128xf32> to vector<8x32xf32>
    %443 = vector.extract_strided_slice %441 {offsets = [0, 32], sizes = [8, 32], strides = [1, 1]} : vector<8x128xf32> to vector<8x32xf32>
    %444 = vector.extract_strided_slice %441 {offsets = [0, 64], sizes = [8, 32], strides = [1, 1]} : vector<8x128xf32> to vector<8x32xf32>
    %445 = vector.extract_strided_slice %441 {offsets = [0, 96], sizes = [8, 32], strides = [1, 1]} : vector<8x128xf32> to vector<8x32xf32>
    %446 = arith.mulf %443, %396 : vector<8x32xf32>
    %447 = arith.mulf %442, %444 : vector<8x32xf32>
    %448 = arith.addf %446, %447 : vector<8x32xf32>
    %449 = math.tanh %448 : vector<8x32xf32>
    %450 = arith.mulf %445, %449 : vector<8x32xf32>
    %451 = arith.select %427, %450, %395 : vector<8x32xi1>, vector<8x32xf32>
    %452 = arith.truncf %451 : vector<8x32xf32> to vector<8x32xbf16>
    %cst_64 = arith.constant dense<0.000000e+00> : vector<8x128xf32>
    %453 = tpu.matmul %452, %3, %cst_64 {dimension_numbers = #tpu.dot_dimension_numbers<[1], [0], [0], [1], [0, 0, 1, 1], [], []>} : vector<8x32xbf16>, vector<32x128xbf16>, vector<8x128xf32> -> vector<8x128xf32>
    %454 = arith.truncf %422 : vector<8x32xf32> to vector<8x32xbf16>
    %cst_65 = arith.constant dense<0.000000e+00> : vector<8x128xf32>
    %455 = tpu.matmul %454, %5, %cst_65 {dimension_numbers = #tpu.dot_dimension_numbers<[1], [0], [0], [1], [0, 0, 1, 1], [], []>} : vector<8x32xbf16>, vector<32x128xbf16>, vector<8x128xf32> -> vector<8x128xf32>
    %456 = arith.addf %453, %455 : vector<8x128xf32>
    %457 = vector.broadcast %7 : vector<1x128xf32> to vector<8x128xf32>
    %458 = arith.addf %456, %457 : vector<8x128xf32>
    %459 = arith.negf %458 : vector<8x128xf32>
    %460 = math.exp %459 : vector<8x128xf32>
    %cst_66 = arith.constant 1.000000e+00 : f32
    %461 = vector.broadcast %cst_66 : f32 to vector<8x128xf32>
    %462 = arith.addf %461, %460 : vector<8x128xf32>
    %463 = arith.divf %461, %462 : vector<8x128xf32>
    %464 = vector.broadcast %16 : vector<1x128xf32> to vector<8x128xf32>
    %465 = arith.mulf %463, %464 : vector<8x128xf32>
    %466 = vector.broadcast %19 : vector<1x128xf32> to vector<8x128xf32>
    %467 = arith.addf %465, %466 : vector<8x128xf32>
    %468 = vector.extract_strided_slice %467 {offsets = [0, 0], sizes = [8, 32], strides = [1, 1]} : vector<8x128xf32> to vector<8x32xf32>
    %469 = vector.extract_strided_slice %467 {offsets = [0, 32], sizes = [8, 32], strides = [1, 1]} : vector<8x128xf32> to vector<8x32xf32>
    %470 = vector.extract_strided_slice %467 {offsets = [0, 64], sizes = [8, 32], strides = [1, 1]} : vector<8x128xf32> to vector<8x32xf32>
    %471 = vector.extract_strided_slice %467 {offsets = [0, 96], sizes = [8, 32], strides = [1, 1]} : vector<8x128xf32> to vector<8x32xf32>
    %472 = arith.mulf %469, %423 : vector<8x32xf32>
    %473 = arith.mulf %468, %470 : vector<8x32xf32>
    %474 = arith.addf %472, %473 : vector<8x32xf32>
    %475 = math.tanh %474 : vector<8x32xf32>
    %476 = arith.mulf %471, %475 : vector<8x32xf32>
    %477 = arith.select %427, %476, %422 : vector<8x32xi1>, vector<8x32xf32>
    %c0_67 = arith.constant 0 : index
    %c0_68 = arith.constant 0 : index
    %478 = vector.load %arg9[%c0_67, %c0_68] : memref<32x16xf32, #tpu.memory_space<vmem>>, vector<32x16xf32>
    %cst_69 = arith.constant dense<0.000000e+00> : vector<8x16xf32>
    %479 = tpu.matmul %477, %478, %cst_69 {dimension_numbers = #tpu.dot_dimension_numbers<[1], [0], [0], [1], [0, 0, 1, 1], [], []>} : vector<8x32xf32>, vector<32x16xf32>, vector<8x16xf32> -> vector<8x16xf32>
    %c0_70 = arith.constant 0 : index
    %c0_71 = arith.constant 0 : index
    %480 = vector.load %arg10[%c0_70, %c0_71] : memref<8x16xf32, #tpu.memory_space<vmem>>, vector<8x16xf32>
    %481 = arith.addf %479, %480 : vector<8x16xf32>
    %cst_72 = arith.constant 0.000000e+00 : f32
    %482 = vector.broadcast %cst_72 : f32 to vector<8x16xf32>
    %483 = arith.cmpf oge, %481, %482 : vector<8x16xf32>
    %cst_73 = arith.constant 0.00999999977 : f32
    %484 = vector.broadcast %cst_73 : f32 to vector<8x16xf32>
    %485 = arith.mulf %484, %481 : vector<8x16xf32>
    %486 = arith.select %483, %481, %485 : vector<8x16xi1>, vector<8x16xf32>
    %c0_74 = arith.constant 0 : index
    %c0_75 = arith.constant 0 : index
    %487 = vector.load %arg11[%c0_74, %c0_75] : memref<16x128xf32, #tpu.memory_space<vmem>>, vector<16x128xf32>
    %cst_76 = arith.constant dense<0.000000e+00> : vector<8x128xf32>
    %488 = tpu.matmul %486, %487, %cst_76 {dimension_numbers = #tpu.dot_dimension_numbers<[1], [0], [0], [1], [0, 0, 1, 1], [], []>} : vector<8x16xf32>, vector<16x128xf32>, vector<8x128xf32> -> vector<8x128xf32>
    %c0_77 = arith.constant 0 : index
    %c0_78 = arith.constant 0 : index
    %489 = vector.load %arg12[%c0_77, %c0_78] : memref<1x128xf32, #tpu.memory_space<vmem>>, vector<1x128xf32>
    %490 = vector.broadcast %489 : vector<1x128xf32> to vector<8x128xf32>
    %491 = arith.addf %488, %490 : vector<8x128xf32>
    %c0_79 = arith.constant 0 : index
    %c0_80 = arith.constant 0 : index
    %492 = vector.load %arg13[%c0_79, %c0_80] : memref<8x128xf32, #tpu.memory_space<vmem>>, vector<8x128xf32>
    tpu.vector_store %arg13[%c0_79, %c0_80], %491 {strides = array<i32>} : memref<8x128xf32, #tpu.memory_space<vmem>>, vector<8x128xf32>,
    return
  }
  func.func @transform_0(%arg0: i32) -> (i32, i32, i32) {
    %c0_i32 = arith.constant 0 : i32
    %c0_i32_0 = arith.constant 0 : i32
    %c0_i32_1 = arith.constant 0 : i32
    return %c0_i32, %arg0, %c0_i32_0 : i32, i32, i32
  }
  func.func @transform_1(%arg0: i32) -> (i32, i32) {
    %c0_i32 = arith.constant 0 : i32
    %c0_i32_0 = arith.constant 0 : i32
    return %arg0, %c0_i32 : i32, i32
  }
  func.func @transform_2(%arg0: i32) -> (i32, i32) {
    %c0_i32 = arith.constant 0 : i32
    %c0_i32_0 = arith.constant 0 : i32
    %c0_i32_1 = arith.constant 0 : i32
    return %c0_i32, %c0_i32_0 : i32, i32
  }
  func.func @transform_3(%arg0: i32) -> (i32, i32) {
    %c0_i32 = arith.constant 0 : i32
    %c0_i32_0 = arith.constant 0 : i32
    %c0_i32_1 = arith.constant 0 : i32
    return %c0_i32, %c0_i32_0 : i32, i32
  }
  func.func @transform_4(%arg0: i32) -> (i32, i32) {
    %c0_i32 = arith.constant 0 : i32
    %c0_i32_0 = arith.constant 0 : i32
    %c0_i32_1 = arith.constant 0 : i32
    return %c0_i32, %c0_i32_0 : i32, i32
  }
  func.func @transform_5(%arg0: i32) -> (i32, i32, i32) {
    %c0_i32 = arith.constant 0 : i32
    %c0_i32_0 = arith.constant 0 : i32
    %c0_i32_1 = arith.constant 0 : i32
    %c0_i32_2 = arith.constant 0 : i32
    return %c0_i32, %c0_i32_0, %c0_i32_1 : i32, i32, i32
  }
  func.func @transform_6(%arg0: i32) -> (i32, i32, i32) {
    %c0_i32 = arith.constant 0 : i32
    %c0_i32_0 = arith.constant 0 : i32
    %c0_i32_1 = arith.constant 0 : i32
    %c0_i32_2 = arith.constant 0 : i32
    return %c0_i32, %c0_i32_0, %c0_i32_1 : i32, i32, i32
  }
  func.func @transform_7(%arg0: i32) -> (i32, i32, i32) {
    %c0_i32 = arith.constant 0 : i32
    %c0_i32_0 = arith.constant 0 : i32
    %c0_i32_1 = arith.constant 0 : i32
    %c0_i32_2 = arith.constant 0 : i32
    return %c0_i32, %c0_i32_0, %c0_i32_1 : i32, i32, i32
  }
  func.func @transform_8(%arg0: i32) -> (i32, i32) {
    %c0_i32 = arith.constant 0 : i32
    %c0_i32_0 = arith.constant 0 : i32
    %c0_i32_1 = arith.constant 0 : i32
    return %c0_i32, %c0_i32_0 : i32, i32
  }
  func.func @transform_9(%arg0: i32) -> (i32, i32) {
    %c0_i32 = arith.constant 0 : i32
    %c0_i32_0 = arith.constant 0 : i32
    return %arg0, %c0_i32 : i32, i32
  }
  func.func @transform_10(%arg0: i32) -> (i32, i32) {
    %c0_i32 = arith.constant 0 : i32
    %c0_i32_0 = arith.constant 0 : i32
    %c0_i32_1 = arith.constant 0 : i32
    return %c0_i32, %c0_i32_0 : i32, i32
  }
  func.func @transform_11(%arg0: i32) -> (i32, i32) {
    %c0_i32 = arith.constant 0 : i32
    %c0_i32_0 = arith.constant 0 : i32
    %c0_i32_1 = arith.constant 0 : i32
    return %c0_i32, %c0_i32_0 : i32, i32
  }
  func.func @transform_12(%arg0: i32) -> (i32, i32) {
    %c0_i32 = arith.constant 0 : i32
    %c0_i32_0 = arith.constant 0 : i32
    return %arg0, %c0_i32 : i32, i32
  }
}

</mosaic_0001>

<llo_original>
// kernel: tpu_custom_call.1
$region0: #{tpu_custom_call.1}
  #allocation0 [shape = 'u32[]', space=smem, size = 0x4, offset = 0x4, fixed_abs, tag = 'smem constant byte address 0x4 - core index']
  #allocation1 [shape = 'u32[144,128]{1,0:T(1,128)}', space=vmem, size = 0x12000, scoped, tag = 'internal scratch']
  %s0 = inlined_call_operand.vmem [shape: bf16[8,8,4], index: 0, kind: input, shape index: {}]
  %s1 = inlined_call_operand.vmem [shape: s32[8,1], index: 1, kind: input, shape index: {}]
  %s2 = inlined_call_operand.vmem [shape: bf16[4,128], index: 2, kind: input, shape index: {}]
  %s3 = inlined_call_operand.vmem [shape: bf16[32,128], index: 3, kind: input, shape index: {}]
  %s4 = inlined_call_operand.vmem [shape: f32[1,128], index: 4, kind: input, shape index: {}]
  %s5 = inlined_call_operand.vmem [shape: bf16[1,32,128], index: 5, kind: input, shape index: {}]
  %s6 = inlined_call_operand.vmem [shape: bf16[1,32,128], index: 6, kind: input, shape index: {}]
  %s7 = inlined_call_operand.vmem [shape: f32[1,1,128], index: 7, kind: input, shape index: {}]
  %s8 = inlined_call_operand.vmem [shape: f32[32,16], index: 8, kind: input, shape index: {}]
  %s9 = inlined_call_operand.vmem [shape: f32[8,16], index: 9, kind: input, shape index: {}]
  %s10 = inlined_call_operand.vmem [shape: f32[16,128], index: 10, kind: input, shape index: {}]
  %s11 = inlined_call_operand.vmem [shape: f32[1,128], index: 11, kind: input, shape index: {}]
  %s12 = inlined_call_operand.hbm [shape: f32[8,128], index: 12, kind: output, shape index: {}]
  %s13 = sld [smem:[#allocation0]]
  $region58: #{tpu_custom_call.1} parent=0
    _
  %s15 = ssub.s32 1, %s13
  %s16 = scalar_select 0, %s15, %s13
  $region1: #{tpu_custom_call.1} parent=0
    #allocation2 [shape = 'u8[4096]{0}', space=vmem, size = 0x1000, scoped, tag = 'output window, operand 0, single buffered']
    #allocation3 [shape = 's32[1]{0}', space=sflag, size = 0x4, scoped, tag = 'scoped memory for tpu_custom_call.1']
    %17 = vsyncpa [#allocation3], 0
    // Predicated region
    $region2: #{tpu_custom_call.1} parent=1 // pred_check
      _
    $region3: #{tpu_custom_call.1} parent=1 // pred_check_branch
      %19 = sbr.rel (0) target = $region5
    $region4: #{tpu_custom_call.1} parent=1 // pred_region
      _
    $region5: #{tpu_custom_call.1} parent=1 // pred_fallthru
      _
    // Predicated region
    $region6: #{tpu_custom_call.1} parent=1 // pred_check
      _
    $region7: #{tpu_custom_call.1} parent=1 // pred_check_branch
      %21 = sbr.rel (0) target = $region9
    $region8: #{tpu_custom_call.1} parent=1 // pred_region
      _
    $region9: #{tpu_custom_call.1} parent=1 // pred_fallthru
      _
    // Predicated region
    $region10: #{tpu_custom_call.1} parent=1 // pred_check
      _
    $region11: #{tpu_custom_call.1} parent=1 // pred_check_branch
      %23 = sbr.rel (0) target = $region13
    $region12: #{tpu_custom_call.1} parent=1 // pred_region
      _
    $region13: #{tpu_custom_call.1} parent=1 // pred_fallthru
      _
    // Predicated region
    $region14: #{tpu_custom_call.1} parent=1 // pred_check
      _
    $region15: #{tpu_custom_call.1} parent=1 // pred_check_branch
      %25 = sbr.rel (0) target = $region17
    $region16: #{tpu_custom_call.1} parent=1 // pred_region
      _
    $region17: #{tpu_custom_call.1} parent=1 // pred_fallthru
      _
    // Predicated region
    $region18: #{tpu_custom_call.1} parent=1 // pred_check
      _
    $region19: #{tpu_custom_call.1} parent=1 // pred_check_branch
      %27 = sbr.rel (0) target = $region21
    $region20: #{tpu_custom_call.1} parent=1 // pred_region
      _
    $region21: #{tpu_custom_call.1} parent=1 // pred_fallthru
      _
    // Predicated region
    $region22: #{tpu_custom_call.1} parent=1 // pred_check
      _
    $region23: #{tpu_custom_call.1} parent=1 // pred_check_branch
      %29 = sbr.rel (0) target = $region25
    $region24: #{tpu_custom_call.1} parent=1 // pred_region
      _
    $region25: #{tpu_custom_call.1} parent=1 // pred_fallthru
      _
    // Predicated region
    $region26: #{tpu_custom_call.1} parent=1 // pred_check
      _
    $region27: #{tpu_custom_call.1} parent=1 // pred_check_branch
      %31 = sbr.rel (0) target = $region29
    $region28: #{tpu_custom_call.1} parent=1 // pred_region
      _
    $region29: #{tpu_custom_call.1} parent=1 // pred_fallthru
      _
    // Predicated region
    $region30: #{tpu_custom_call.1} parent=1 // pred_check
      _
    $region31: #{tpu_custom_call.1} parent=1 // pred_check_branch
      %33 = sbr.rel (0) target = $region33
    $region32: #{tpu_custom_call.1} parent=1 // pred_region
      _
    $region33: #{tpu_custom_call.1} parent=1 // pred_fallthru
      _
    // Predicated region
    $region34: #{tpu_custom_call.1} parent=1 // pred_check
      _
    $region35: #{tpu_custom_call.1} parent=1 // pred_check_branch
      %35 = sbr.rel (0) target = $region37
    $region36: #{tpu_custom_call.1} parent=1 // pred_region
      _
    $region37: #{tpu_custom_call.1} parent=1 // pred_fallthru
      _
    // Predicated region
    $region38: #{tpu_custom_call.1} parent=1 // pred_check
      _
    $region39: #{tpu_custom_call.1} parent=1 // pred_check_branch
      %37 = sbr.rel (0) target = $region41
    $region40: #{tpu_custom_call.1} parent=1 // pred_region
      _
    $region41: #{tpu_custom_call.1} parent=1 // pred_fallthru
      _
    // Predicated region
    $region42: #{tpu_custom_call.1} parent=1 // pred_check
      _
    $region43: #{tpu_custom_call.1} parent=1 // pred_check_branch
      %39 = sbr.rel (0) target = $region45
    $region44: #{tpu_custom_call.1} parent=1 // pred_region
      _
    $region45: #{tpu_custom_call.1} parent=1 // pred_fallthru
      _
    // Predicated region
    $region46: #{tpu_custom_call.1} parent=1 // pred_check
      _
    $region47: #{tpu_custom_call.1} parent=1 // pred_check_branch
      %41 = sbr.rel (0) target = $region49
    $region48: #{tpu_custom_call.1} parent=1 // pred_region
      _
    $region49: #{tpu_custom_call.1} parent=1 // pred_fallthru
      _
    %v43 = vld [vmem:[%s1] sm:$0xff]
    %v44 = vld [vmem:[%s3] sm:$0xf]
    %v45 = vld [vmem:[%s3 + $0x4] sm:$0xf]
    %v46 = vld [vmem:[%s3 + $0x8] sm:$0xf]
    %v47 = vld [vmem:[%s3 + $0xc] sm:$0xf]
    %v48 = vld [vmem:[%s5] sm:$0xf]
    %v49 = vld [vmem:[%s5 + $0x4] sm:$0xf]
    %v50 = vld [vmem:[%s5 + $0x8] sm:$0xf]
    %v51 = vld [vmem:[%s5 + $0xc] sm:$0xf]
    %v52 = vld [vmem:[%s6] sm:$0xf]
    %v53 = vld [vmem:[%s6 + $0x4] sm:$0xf]
    %v54 = vld [vmem:[%s6 + $0x8] sm:$0xf]
    %v55 = vld [vmem:[%s6 + $0xc] sm:$0xf]
    %v56 = vld [vmem:[%s7] sm:$0x1]
    %v57 = vlaneseq
    %v58 = vand.u32 %v57, 127
    %vm59 = vcmp.ge.s32.totalorder %v58, 64
    %vm60 = vcmp.lt.s32.totalorder %v58, 96
    %vm61 = vmand %vm59, %vm60
    %v62 = vsel %vm61, 2.0, 1.0
    %v63 = vsel %vm61, -1.0, 0.0
    %v64 = vld [vmem:[%s0] sm:$0xf]
    %v65 = vld [vmem:[%s0 + $0x4] sm:$0xf]
    %v66 = vld [vmem:[%s0 + $0x8] sm:$0xf]
    %v67 = vld [vmem:[%s0 + $0xc] sm:$0xf]
    %v68 = vld [vmem:[%s0 + $0x10] sm:$0xf]
    %v69 = vld [vmem:[%s0 + $0x14] sm:$0xf]
    %v70 = vld [vmem:[%s0 + $0x18] sm:$0xf]
    %v71 = vld [vmem:[%s0 + $0x1c] sm:$0xf]
    %v72 = vld [vmem:[%s2] sm:$0x3]
    %v73 = vld [vmem:[%s4] sm:$0x1]
    %v75 = vlaneseq
    %v76 = vshrl.u32 %v75, 7
    %v77 = vsub.s32 0, %v76
    %v78 = vrot.slane %v73, %v77
    %v88 = vunpack.c.l.b16 %v64
    %v89 = vunpack.c.l.b16 %v65
    %v90 = vunpack.c.l.b16 %v66
    %v91 = vunpack.c.l.b16 %v67
    %v92 = vunpack.c.l.b16 %v68
    %v93 = vunpack.c.l.b16 %v69
    %v94 = vunpack.c.l.b16 %v70
    %v95 = vunpack.c.l.b16 %v71
    %v96 = vpack.c.b16 %v89, %v88
    %v97 = vpack.c.b16 %v91, %v90
    %v98 = vpack.c.b16 %v93, %v92
    %v99 = vpack.c.b16 %v95, %v94
    %vm100 = vcmask 31744
    %v102 = vsel %vm100, %v96, 0
    %v105 = vsel %vm100, %v97, 0
    %v108 = vsel %vm100, %v98, 0
    %v111 = vsel %vm100, %v99, 0
    %vm113 = vcmask 1041408
    %v115 = vsel %vm113, %v72, 0
    %117 = vmatprep.subr.bf16.mxu0 0
    %118 = vmatpush1.bf16.msra.mxu0 0
    %119 = vmatprep.subr.bf16.mxu0 0
    %120 = vmatpush1.bf16.msra.mxu0 0
    %121 = vmatprep.subr.bf16.mxu0 0
    %122 = vmatpush1.bf16.msra.mxu0 0
    %123 = vmatprep.subr.bf16.mxu0 0
    %124 = vmatpush1.bf16.msra.mxu0 0
    %125 = vmatprep.subr.bf16.mxu0 0
    %126 = vmatpush1.bf16.msra.mxu0 0
    %127 = vmatprep.subr.bf16.mxu0 0
    %128 = vmatpush1.bf16.msra.mxu0 0
    %129 = vmatprep.subr.bf16.mxu0 0
    %130 = vmatpush1.bf16.msra.mxu0 0
    %131 = vmatprep.subr.bf16.mxu0 0
    %132 = vmatpush1.bf16.msra.mxu0 %v115
    %133 = vmatprep.subr.bf16.mxu0 0
    %134 = vmatpush2.bf16.msra.mxu0 0
    %135 = vmatprep.subr.bf16.mxu0 0
    %136 = vmatpush2.bf16.msra.mxu0 0
    %137 = vmatprep.subr.bf16.mxu0 0
    %138 = vmatpush2.bf16.msra.mxu0 0
    %139 = vmatprep.subr.bf16.mxu0 0
    %140 = vmatpush2.bf16.msra.mxu0 0
    %141 = vmatprep.subr.bf16.mxu0 0
    %142 = vmatpush2.bf16.msra.mxu0 0
    %143 = vmatprep.subr.bf16.mxu0 0
    %144 = vmatpush2.bf16.msra.mxu0 0
    %145 = vmatprep.subr.bf16.mxu0 0
    %146 = vmatpush2.bf16.msra.mxu0 0
    %147 = vmatprep.subr.bf16.mxu0 0
    %148 = vmatpush2.bf16.msra.mxu0 0
    %149 = vmatprep.mubr.bf16.mxu0 0
    %150 = vmatmul.mubr.bf16.gmra.mxu0 %v102
    %v151 = vpop.f32.mrf.mxu0
    %v152 = vadd.f32 %v78, %v151
    %v153 = vpop.f32.mrf.mxu0
    %v154 = vpop.f32.mrf.mxu0
    %v155 = vadd.f32 %v78, %v154
    %v156 = vpop.f32.mrf.mxu0
    %157 = vmatprep.mubr.bf16.mxu0 0
    %158 = vmatmul.mubr.bf16.gmra.mxu0 %v105
    %v159 = vpop.f32.mrf.mxu0
    %v160 = vadd.f32 %v78, %v159
    %v161 = vpop.f32.mrf.mxu0
    %v162 = vpop.f32.mrf.mxu0
    %v163 = vadd.f32 %v78, %v162
    %v164 = vpop.f32.mrf.mxu0
    %165 = vmatprep.mubr.bf16.mxu0 0
    %166 = vmatmul.mubr.bf16.gmra.mxu0 %v108
    %v167 = vpop.f32.mrf.mxu0
    %v168 = vadd.f32 %v78, %v167
    %v169 = vpop.f32.mrf.mxu0
    %v170 = vpop.f32.mrf.mxu0
    %v171 = vadd.f32 %v78, %v170
    %v172 = vpop.f32.mrf.mxu0
    %173 = vmatprep.mubr.bf16.mxu0 0
    %174 = vmatmul.mubr.bf16.gmra.mxu0 %v111
    %v175 = vpop.f32.mrf.mxu0
    %v176 = vadd.f32 %v78, %v175
    %v177 = vpop.f32.mrf.mxu0
    %v178 = vpop.f32.mrf.mxu0
    %v179 = vadd.f32 %v78, %v178
    %v180 = vpop.f32.mrf.mxu0
    %181 = vdwg.mxu0
    %vm182 = vcmp.gt.s32.totalorder %v43, 0
    %v183 = vsel %vm182, 1, 0
    %184 = vset.pattern.permute.xlu0 0
    %185 = vperm.xlu0 %184, %v183
    %v186 = vpop.permute.xlu0 %185
    %vm187 = vcmp.eq.s32.totalorder %v186, 1
    %v192 = vunpack.c.l.b16 %v44
    %v193 = vunpack.c.l.b16 %v45
    %v194 = vunpack.c.l.b16 %v46
    %v195 = vunpack.c.l.b16 %v47
    %v196 = vpack.c.b16 %v193, %v192
    %v197 = vpack.c.b16 %v195, %v194
    %vm200 = vcmask 261120
    %v202 = vsel %vm200, 0, 0
    %204 = vmatprep.subr.bf16.mxu0 0
    %205 = vmatpush1.bf16.msra.mxu0 0
    %206 = vmatprep.subr.bf16.mxu0 0
    %207 = vmatpush1.bf16.msra.mxu0 0
    %208 = vmatprep.subr.bf16.mxu0 0
    %209 = vmatpush1.bf16.msra.mxu0 0
    %210 = vmatprep.subr.bf16.mxu0 0
    %211 = vmatpush1.bf16.msra.mxu0 0
    %212 = vmatprep.subr.bf16.mxu0 0
    %213 = vmatpush1.bf16.msra.mxu0 0
    %214 = vmatprep.subr.bf16.mxu0 0
    %215 = vmatpush1.bf16.msra.mxu0 0
    %216 = vmatprep.subr.bf16.mxu0 0
    %217 = vmatpush1.bf16.msra.mxu0 %v197
    %218 = vmatprep.subr.bf16.mxu0 0
    %219 = vmatpush1.bf16.msra.mxu0 %v196
    %220 = vmatprep.subr.bf16.mxu0 0
    %221 = vmatpush2.bf16.msra.mxu0 0
    %222 = vmatprep.subr.bf16.mxu0 0
    %223 = vmatpush2.bf16.msra.mxu0 0
    %224 = vmatprep.subr.bf16.mxu0 0
    %225 = vmatpush2.bf16.msra.mxu0 0
    %226 = vmatprep.subr.bf16.mxu0 0
    %227 = vmatpush2.bf16.msra.mxu0 0
    %228 = vmatprep.subr.bf16.mxu0 0
    %229 = vmatpush2.bf16.msra.mxu0 0
    %230 = vmatprep.subr.bf16.mxu0 0
    %231 = vmatpush2.bf16.msra.mxu0 0
    %232 = vmatprep.subr.bf16.mxu0 0
    %233 = vmatpush2.bf16.msra.mxu0 0
    %234 = vmatprep.subr.bf16.mxu0 0
    %235 = vmatpush2.bf16.msra.mxu0 0
    %236 = vmatprep.mubr.bf16.mxu0 0
    %237 = vmatmul.mubr.bf16.gmra.mxu0 %v202
    %v238 = vpop.f32.mrf.mxu0
    %v239 = vadd.f32 0.0, %v238
    %v240 = vpop.f32.mrf.mxu0
    %v241 = vpop.f32.mrf.mxu0
    %v242 = vpop.f32.mrf.mxu0
    %243 = vdwg.mxu0
    %v244 = vadd.f32 %v152, %v239
    %v245 = vxor.u32 %v244, 2147483648
    %v246 = vmul.f32 %v245, 1.442695
    %v247 = vpow.pop %v246
    %v248 = vadd.f32 %v247, 1.0
    %v249 = vrcp.pop %v248
    %v250 = vmul.f32 1.0, %v249
    %v251 = vmul.f32 %v250, %v62
    %v252 = vadd.f32 %v251, %v63
    %v253 = vmul.f32 %v252, 0.0
    %255 = vrot.lane.b32.xlu0 %v252, 64
    %v256 = vpop.permute.xlu0 %255
    %v258 = vmul.f32 %v252, %v256
    %260 = vrot.lane.b32.xlu0 %v258, 32
    %v261 = vpop.permute.xlu0 %260
    %v263 = vadd.f32 %v253, %v261
    %v264 = vtanh.pop %v263
    %266 = vrot.lane.b32.xlu0 %v264, 64
    %v267 = vpop.permute.xlu0 %266
    %v269 = vmul.f32 %v252, %v267
    %v270 = vsel %vm187, %v269, 0.0
    %v271 = vsel %vm187, %v263, 0.0
    %v272 = vpack.c.bf16 %v270, %v270
    %v277 = vunpack.c.l.b16 %v52
    %v278 = vunpack.c.l.b16 %v53
    %v279 = vunpack.c.l.b16 %v54
    %v280 = vunpack.c.l.b16 %v55
    %v281 = vpack.c.b16 %v278, %v277
    %v282 = vpack.c.b16 %v280, %v279
    %285 = vmatprep.subr.bf16.mxu0 0
    %286 = vmatpush1.bf16.msra.mxu0 0
    %287 = vmatprep.subr.bf16.mxu0 0
    %288 = vmatpush1.bf16.msra.mxu0 0
    %289 = vmatprep.subr.bf16.mxu0 0
    %290 = vmatpush1.bf16.msra.mxu0 0
    %291 = vmatprep.subr.bf16.mxu0 0
    %292 = vmatpush1.bf16.msra.mxu0 0
    %293 = vmatprep.subr.bf16.mxu0 0
    %294 = vmatpush1.bf16.msra.mxu0 0
    %295 = vmatprep.subr.bf16.mxu0 0
    %296 = vmatpush1.bf16.msra.mxu0 0
    %297 = vmatprep.subr.bf16.mxu0 0
    %298 = vmatpush1.bf16.msra.mxu0 %v282
    %299 = vmatprep.subr.bf16.mxu0 0
    %300 = vmatpush1.bf16.msra.mxu0 %v281
    %301 = vmatprep.subr.bf16.mxu0 0
    %302 = vmatpush2.bf16.msra.mxu0 0
    %303 = vmatprep.subr.bf16.mxu0 0
    %304 = vmatpush2.bf16.msra.mxu0 0
    %305 = vmatprep.subr.bf16.mxu0 0
    %306 = vmatpush2.bf16.msra.mxu0 0
    %307 = vmatprep.subr.bf16.mxu0 0
    %308 = vmatpush2.bf16.msra.mxu0 0
    %309 = vmatprep.subr.bf16.mxu0 0
    %310 = vmatpush2.bf16.msra.mxu0 0
    %311 = vmatprep.subr.bf16.mxu0 0
    %312 = vmatpush2.bf16.msra.mxu0 0
    %313 = vmatprep.subr.bf16.mxu0 0
    %314 = vmatpush2.bf16.msra.mxu0 0
    %315 = vmatprep.subr.bf16.mxu0 0
    %316 = vmatpush2.bf16.msra.mxu0 0
    %317 = vmatprep.mubr.bf16.mxu0 0
    %318 = vmatmul.mubr.bf16.gmra.mxu0 %v202
    %v319 = vpop.f32.mrf.mxu0
    %v320 = vadd.f32 0.0, %v319
    %v321 = vpop.f32.mrf.mxu0
    %v322 = vpop.f32.mrf.mxu0
    %v323 = vpop.f32.mrf.mxu0
    %324 = vdwg.mxu0
    %326 = vrot.lane.b32.xlu0 %v272, 32
    %v327 = vpop.permute.xlu0 %326
    %v332 = vunpack.c.l.b16 %v48
    %v333 = vunpack.c.l.b16 %v49
    %v334 = vunpack.c.l.b16 %v50
    %v335 = vunpack.c.l.b16 %v51
    %v336 = vpack.c.b16 %v333, %v332
    %v337 = vpack.c.b16 %v335, %v334
    %v341 = vsel %vm200, %v327, 0
    %343 = vmatprep.subr.bf16.mxu0 0
    %344 = vmatpush1.bf16.msra.mxu0 0
    %345 = vmatprep.subr.bf16.mxu0 0
    %346 = vmatpush1.bf16.msra.mxu0 0
    %347 = vmatprep.subr.bf16.mxu0 0
    %348 = vmatpush1.bf16.msra.mxu0 0
    %349 = vmatprep.subr.bf16.mxu0 0
    %350 = vmatpush1.bf16.msra.mxu0 0
    %351 = vmatprep.subr.bf16.mxu0 0
    %352 = vmatpush1.bf16.msra.mxu0 0
    %353 = vmatprep.subr.bf16.mxu0 0
    %354 = vmatpush1.bf16.msra.mxu0 0
    %355 = vmatprep.subr.bf16.mxu0 0
    %356 = vmatpush1.bf16.msra.mxu0 %v337
    %357 = vmatprep.subr.bf16.mxu0 0
    %358 = vmatpush1.bf16.msra.mxu0 %v336
    %359 = vmatprep.subr.bf16.mxu0 0
    %360 = vmatpush2.bf16.msra.mxu0 0
    %361 = vmatprep.subr.bf16.mxu0 0
    %362 = vmatpush2.bf16.msra.mxu0 0
    %363 = vmatprep.subr.bf16.mxu0 0
    %364 = vmatpush2.bf16.msra.mxu0 0
    %365 = vmatprep.subr.bf16.mxu0 0
    %366 = vmatpush2.bf16.msra.mxu0 0
    %367 = vmatprep.subr.bf16.mxu0 0
    %368 = vmatpush2.bf16.msra.mxu0 0
    %369 = vmatprep.subr.bf16.mxu0 0
    %370 = vmatpush2.bf16.msra.mxu0 0
    %371 = vmatprep.subr.bf16.mxu0 0
    %372 = vmatpush2.bf16.msra.mxu0 0
    %373 = vmatprep.subr.bf16.mxu0 0
    %374 = vmatpush2.bf16.msra.mxu0 0
    %375 = vmatprep.mubr.bf16.mxu0 0
    %376 = vmatmul.mubr.bf16.gmra.mxu0 %v341
    %v377 = vpop.f32.mrf.mxu0
    %v378 = vadd.f32 %v320, %v377
    %v379 = vpop.f32.mrf.mxu0
    %v380 = vpop.f32.mrf.mxu0
    %v381 = vpop.f32.mrf.mxu0
    %382 = vdwg.mxu0
    %v384 = vlaneseq
    %v385 = vshrl.u32 %v384, 7
    %v386 = vsub.s32 0, %v385
    %v387 = vrot.slane %v56, %v386
    %v389 = vadd.f32 %v378, %v387
    %v390 = vxor.u32 %v389, 2147483648
    %v391 = vmul.f32 %v390, 1.442695
    %v392 = vpow.pop %v391
    %v393 = vadd.f32 %v392, 1.0
    %v394 = vrcp.pop %v393
    %v395 = vmul.f32 1.0, %v394
    %v396 = vmul.f32 %v395, %v62
    %v397 = vadd.f32 %v396, %v63
    %v398 = vmul.f32 %v397, 0.0
    %400 = vrot.lane.b32.xlu0 %v397, 64
    %v401 = vpop.permute.xlu0 %400
    %v403 = vmul.f32 %v397, %v401
    %405 = vrot.lane.b32.xlu0 %v403, 32
    %v406 = vpop.permute.xlu0 %405
    %v408 = vadd.f32 %v398, %v406
    %v409 = vtanh.pop %v408
    %411 = vrot.lane.b32.xlu0 %v409, 64
    %v412 = vpop.permute.xlu0 %411
    %v414 = vmul.f32 %v397, %v412
    %v415 = vsel %vm187, %v414, 0.0
    %v416 = vsel %vm187, %v408, 0.0
    %vm417 = vcmp.gt.s32.totalorder %v43, 1
    %v418 = vsel %vm417, 1, 0
    %419 = vset.pattern.permute.xlu0 0
    %420 = vperm.xlu0 %419, %v418
    %v421 = vpop.permute.xlu0 %420
    %vm422 = vcmp.eq.s32.totalorder %v421, 1
    %423 = vmatprep.subr.bf16.mxu0 0
    %424 = vmatpush1.bf16.msra.mxu0 0
    %425 = vmatprep.subr.bf16.mxu0 0
    %426 = vmatpush1.bf16.msra.mxu0 0
    %427 = vmatprep.subr.bf16.mxu0 0
    %428 = vmatpush1.bf16.msra.mxu0 0
    %429 = vmatprep.subr.bf16.mxu0 0
    %430 = vmatpush1.bf16.msra.mxu0 0
    %431 = vmatprep.subr.bf16.mxu0 0
    %432 = vmatpush1.bf16.msra.mxu0 0
    %433 = vmatprep.subr.bf16.mxu0 0
    %434 = vmatpush1.bf16.msra.mxu0 0
    %435 = vmatprep.subr.bf16.mxu0 0
    %436 = vmatpush1.bf16.msra.mxu0 %v197
    %437 = vmatprep.subr.bf16.mxu0 0
    %438 = vmatpush1.bf16.msra.mxu0 %v196
    %439 = vmatprep.subr.bf16.mxu0 0
    %440 = vmatpush2.bf16.msra.mxu0 0
    %441 = vmatprep.subr.bf16.mxu0 0
    %442 = vmatpush2.bf16.msra.mxu0 0
    %443 = vmatprep.subr.bf16.mxu0 0
    %444 = vmatpush2.bf16.msra.mxu0 0
    %445 = vmatprep.subr.bf16.mxu0 0
    %446 = vmatpush2.bf16.msra.mxu0 0
    %447 = vmatprep.subr.bf16.mxu0 0
    %448 = vmatpush2.bf16.msra.mxu0 0
    %449 = vmatprep.subr.bf16.mxu0 0
    %450 = vmatpush2.bf16.msra.mxu0 0
    %451 = vmatprep.subr.bf16.mxu0 0
    %452 = vmatpush2.bf16.msra.mxu0 0
    %453 = vmatprep.subr.bf16.mxu0 0
    %454 = vmatpush2.bf16.msra.mxu0 0
    %455 = vmatprep.mubr.bf16.mxu0 0
    %456 = vmatmul.mubr.bf16.gmra.mxu0 %v341
    %v457 = vpop.f32.mrf.mxu0
    %v458 = vadd.f32 0.0, %v457
    %v459 = vpop.f32.mrf.mxu0
    %v460 = vpop.f32.mrf.mxu0
    %v461 = vpop.f32.mrf.mxu0
    %462 = vdwg.mxu0
    %v463 = vadd.f32 %v155, %v458
    %v464 = vxor.u32 %v463, 2147483648
    %v465 = vmul.f32 %v464, 1.442695
    %v466 = vpow.pop %v465
    %v467 = vadd.f32 %v466, 1.0
    %v468 = vrcp.pop %v467
    %v469 = vmul.f32 1.0, %v468
    %v470 = vmul.f32 %v469, %v62
    %v471 = vadd.f32 %v470, %v63
    %v472 = vmul.f32 %v471, %v271
    %474 = vrot.lane.b32.xlu0 %v471, 64
    %v475 = vpop.permute.xlu0 %474
    %v477 = vmul.f32 %v471, %v475
    %479 = vrot.lane.b32.xlu0 %v477, 32
    %v480 = vpop.permute.xlu0 %479
    %v482 = vadd.f32 %v472, %v480
    %v483 = vtanh.pop %v482
    %485 = vrot.lane.b32.xlu0 %v483, 64
    %v486 = vpop.permute.xlu0 %485
    %v488 = vmul.f32 %v471, %v486
    %v489 = vsel %vm422, %v488, %v270
    %v490 = vsel %vm422, %v482, %v271
    %v491 = vpack.c.bf16 %v489, %v489
    %v492 = vpack.c.bf16 %v415, %v415
    %494 = vrot.lane.b32.xlu0 %v492, 32
    %v495 = vpop.permute.xlu0 %494
    %v497 = vsel %vm200, %v495, 0
    %499 = vmatprep.subr.bf16.mxu0 0
    %500 = vmatpush1.bf16.msra.mxu0 0
    %501 = vmatprep.subr.bf16.mxu0 0
    %502 = vmatpush1.bf16.msra.mxu0 0
    %503 = vmatprep.subr.bf16.mxu0 0
    %504 = vmatpush1.bf16.msra.mxu0 0
    %505 = vmatprep.subr.bf16.mxu0 0
    %506 = vmatpush1.bf16.msra.mxu0 0
    %507 = vmatprep.subr.bf16.mxu0 0
    %508 = vmatpush1.bf16.msra.mxu0 0
    %509 = vmatprep.subr.bf16.mxu0 0
    %510 = vmatpush1.bf16.msra.mxu0 0
    %511 = vmatprep.subr.bf16.mxu0 0
    %512 = vmatpush1.bf16.msra.mxu0 %v282
    %513 = vmatprep.subr.bf16.mxu0 0
    %514 = vmatpush1.bf16.msra.mxu0 %v281
    %515 = vmatprep.subr.bf16.mxu0 0
    %516 = vmatpush2.bf16.msra.mxu0 0
    %517 = vmatprep.subr.bf16.mxu0 0
    %518 = vmatpush2.bf16.msra.mxu0 0
    %519 = vmatprep.subr.bf16.mxu0 0
    %520 = vmatpush2.bf16.msra.mxu0 0
    %521 = vmatprep.subr.bf16.mxu0 0
    %522 = vmatpush2.bf16.msra.mxu0 0
    %523 = vmatprep.subr.bf16.mxu0 0
    %524 = vmatpush2.bf16.msra.mxu0 0
    %525 = vmatprep.subr.bf16.mxu0 0
    %526 = vmatpush2.bf16.msra.mxu0 0
    %527 = vmatprep.subr.bf16.mxu0 0
    %528 = vmatpush2.bf16.msra.mxu0 0
    %529 = vmatprep.subr.bf16.mxu0 0
    %530 = vmatpush2.bf16.msra.mxu0 0
    %531 = vmatprep.mubr.bf16.mxu0 0
    %532 = vmatmul.mubr.bf16.gmra.mxu0 %v497
    %v533 = vpop.f32.mrf.mxu0
    %v534 = vadd.f32 0.0, %v533
    %v535 = vpop.f32.mrf.mxu0
    %v536 = vpop.f32.mrf.mxu0
    %v537 = vpop.f32.mrf.mxu0
    %538 = vdwg.mxu0
    %540 = vrot.lane.b32.xlu0 %v491, 32
    %v541 = vpop.permute.xlu0 %540
    %v543 = vsel %vm200, %v541, 0
    %545 = vmatprep.subr.bf16.mxu0 0
    %546 = vmatpush1.bf16.msra.mxu0 0
    %547 = vmatprep.subr.bf16.mxu0 0
    %548 = vmatpush1.bf16.msra.mxu0 0
    %549 = vmatprep.subr.bf16.mxu0 0
    %550 = vmatpush1.bf16.msra.mxu0 0
    %551 = vmatprep.subr.bf16.mxu0 0
    %552 = vmatpush1.bf16.msra.mxu0 0
    %553 = vmatprep.subr.bf16.mxu0 0
    %554 = vmatpush1.bf16.msra.mxu0 0
    %555 = vmatprep.subr.bf16.mxu0 0
    %556 = vmatpush1.bf16.msra.mxu0 0
    %557 = vmatprep.subr.bf16.mxu0 0
    %558 = vmatpush1.bf16.msra.mxu0 %v337
    %559 = vmatprep.subr.bf16.mxu0 0
    %560 = vmatpush1.bf16.msra.mxu0 %v336
    %561 = vmatprep.subr.bf16.mxu0 0
    %562 = vmatpush2.bf16.msra.mxu0 0
    %563 = vmatprep.subr.bf16.mxu0 0
    %564 = vmatpush2.bf16.msra.mxu0 0
    %565 = vmatprep.subr.bf16.mxu0 0
    %566 = vmatpush2.bf16.msra.mxu0 0
    %567 = vmatprep.subr.bf16.mxu0 0
    %568 = vmatpush2.bf16.msra.mxu0 0
    %569 = vmatprep.subr.bf16.mxu0 0
    %570 = vmatpush2.bf16.msra.mxu0 0
    %571 = vmatprep.subr.bf16.mxu0 0
    %572 = vmatpush2.bf16.msra.mxu0 0
    %573 = vmatprep.subr.bf16.mxu0 0
    %574 = vmatpush2.bf16.msra.mxu0 0
    %575 = vmatprep.subr.bf16.mxu0 0
    %576 = vmatpush2.bf16.msra.mxu0 0
    %577 = vmatprep.mubr.bf16.mxu0 0
    %578 = vmatmul.mubr.bf16.gmra.mxu0 %v543
    %v579 = vpop.f32.mrf.mxu0
    %v580 = vadd.f32 %v534, %v579
    %v581 = vpop.f32.mrf.mxu0
    %v582 = vpop.f32.mrf.mxu0
    %v583 = vpop.f32.mrf.mxu0
    %584 = vdwg.mxu0
    %v585 = vadd.f32 %v580, %v387
    %v586 = vxor.u32 %v585, 2147483648
    %v587 = vmul.f32 %v586, 1.442695
    %v588 = vpow.pop %v587
    %v589 = vadd.f32 %v588, 1.0
    %v590 = vrcp.pop %v589
    %v591 = vmul.f32 1.0, %v590
    %v592 = vmul.f32 %v591, %v62
    %v593 = vadd.f32 %v592, %v63
    %v594 = vmul.f32 %v593, %v416
    %596 = vrot.lane.b32.xlu0 %v593, 64
    %v597 = vpop.permute.xlu0 %596
    %v599 = vmul.f32 %v593, %v597
    %601 = vrot.lane.b32.xlu0 %v599, 32
    %v602 = vpop.permute.xlu0 %601
    %v604 = vadd.f32 %v594, %v602
    %v605 = vtanh.pop %v604
    %607 = vrot.lane.b32.xlu0 %v605, 64
    %v608 = vpop.permute.xlu0 %607
    %v610 = vmul.f32 %v593, %v608
    %v611 = vsel %vm422, %v610, %v415
    %v612 = vsel %vm422, %v604, %v416
    %vm613 = vcmp.gt.s32.totalorder %v43, 2
    %v614 = vsel %vm613, 1, 0
    %615 = vset.pattern.permute.xlu0 0
    %616 = vperm.xlu0 %615, %v614
    %v617 = vpop.permute.xlu0 %616
    %vm618 = vcmp.eq.s32.totalorder %v617, 1
    %619 = vmatprep.subr.bf16.mxu0 0
    %620 = vmatpush1.bf16.msra.mxu0 0
    %621 = vmatprep.subr.bf16.mxu0 0
    %622 = vmatpush1.bf16.msra.mxu0 0
    %623 = vmatprep.subr.bf16.mxu0 0
    %624 = vmatpush1.bf16.msra.mxu0 0
    %625 = vmatprep.subr.bf16.mxu0 0
    %626 = vmatpush1.bf16.msra.mxu0 0
    %627 = vmatprep.subr.bf16.mxu0 0
    %628 = vmatpush1.bf16.msra.mxu0 0
    %629 = vmatprep.subr.bf16.mxu0 0
    %630 = vmatpush1.bf16.msra.mxu0 0
    %631 = vmatprep.subr.bf16.mxu0 0
    %632 = vmatpush1.bf16.msra.mxu0 %v197
    %633 = vmatprep.subr.bf16.mxu0 0
    %634 = vmatpush1.bf16.msra.mxu0 %v196
    %635 = vmatprep.subr.bf16.mxu0 0
    %636 = vmatpush2.bf16.msra.mxu0 0
    %637 = vmatprep.subr.bf16.mxu0 0
    %638 = vmatpush2.bf16.msra.mxu0 0
    %639 = vmatprep.subr.bf16.mxu0 0
    %640 = vmatpush2.bf16.msra.mxu0 0
    %641 = vmatprep.subr.bf16.mxu0 0
    %642 = vmatpush2.bf16.msra.mxu0 0
    %643 = vmatprep.subr.bf16.mxu0 0
    %644 = vmatpush2.bf16.msra.mxu0 0
    %645 = vmatprep.subr.bf16.mxu0 0
    %646 = vmatpush2.bf16.msra.mxu0 0
    %647 = vmatprep.subr.bf16.mxu0 0
    %648 = vmatpush2.bf16.msra.mxu0 0
    %649 = vmatprep.subr.bf16.mxu0 0
    %650 = vmatpush2.bf16.msra.mxu0 0
    %651 = vmatprep.mubr.bf16.mxu0 0
    %652 = vmatmul.mubr.bf16.gmra.mxu0 %v543
    %v653 = vpop.f32.mrf.mxu0
    %v654 = vadd.f32 0.0, %v653
    %v655 = vpop.f32.mrf.mxu0
    %v656 = vpop.f32.mrf.mxu0
    %v657 = vpop.f32.mrf.mxu0
    %658 = vdwg.mxu0
    %v659 = vadd.f32 %v160, %v654
    %v660 = vxor.u32 %v659, 2147483648
    %v661 = vmul.f32 %v660, 1.442695
    %v662 = vpow.pop %v661
    %v663 = vadd.f32 %v662, 1.0
    %v664 = vrcp.pop %v663
    %v665 = vmul.f32 1.0, %v664
    %v666 = vmul.f32 %v665, %v62
    %v667 = vadd.f32 %v666, %v63
    %v668 = vmul.f32 %v667, %v490
    %670 = vrot.lane.b32.xlu0 %v667, 64
    %v671 = vpop.permute.xlu0 %670
    %v673 = vmul.f32 %v667, %v671
    %675 = vrot.lane.b32.xlu0 %v673, 32
    %v676 = vpop.permute.xlu0 %675
    %v678 = vadd.f32 %v668, %v676
    %v679 = vtanh.pop %v678
    %681 = vrot.lane.b32.xlu0 %v679, 64
    %v682 = vpop.permute.xlu0 %681
    %v684 = vmul.f32 %v667, %v682
    %v685 = vsel %vm618, %v684, %v489
    %v686 = vsel %vm618, %v678, %v490
    %v687 = vpack.c.bf16 %v685, %v685
    %v688 = vpack.c.bf16 %v611, %v611
    %690 = vrot.lane.b32.xlu0 %v688, 32
    %v691 = vpop.permute.xlu0 %690
    %v693 = vsel %vm200, %v691, 0
    %695 = vmatprep.subr.bf16.mxu0 0
    %696 = vmatpush1.bf16.msra.mxu0 0
    %697 = vmatprep.subr.bf16.mxu0 0
    %698 = vmatpush1.bf16.msra.mxu0 0
    %699 = vmatprep.subr.bf16.mxu0 0
    %700 = vmatpush1.bf16.msra.mxu0 0
    %701 = vmatprep.subr.bf16.mxu0 0
    %702 = vmatpush1.bf16.msra.mxu0 0
    %703 = vmatprep.subr.bf16.mxu0 0
    %704 = vmatpush1.bf16.msra.mxu0 0
    %705 = vmatprep.subr.bf16.mxu0 0
    %706 = vmatpush1.bf16.msra.mxu0 0
    %707 = vmatprep.subr.bf16.mxu0 0
    %708 = vmatpush1.bf16.msra.mxu0 %v282
    %709 = vmatprep.subr.bf16.mxu0 0
    %710 = vmatpush1.bf16.msra.mxu0 %v281
    %711 = vmatprep.subr.bf16.mxu0 0
    %712 = vmatpush2.bf16.msra.mxu0 0
    %713 = vmatprep.subr.bf16.mxu0 0
    %714 = vmatpush2.bf16.msra.mxu0 0
    %715 = vmatprep.subr.bf16.mxu0 0
    %716 = vmatpush2.bf16.msra.mxu0 0
    %717 = vmatprep.subr.bf16.mxu0 0
    %718 = vmatpush2.bf16.msra.mxu0 0
    %719 = vmatprep.subr.bf16.mxu0 0
    %720 = vmatpush2.bf16.msra.mxu0 0
    %721 = vmatprep.subr.bf16.mxu0 0
    %722 = vmatpush2.bf16.msra.mxu0 0
    %723 = vmatprep.subr.bf16.mxu0 0
    %724 = vmatpush2.bf16.msra.mxu0 0
    %725 = vmatprep.subr.bf16.mxu0 0
    %726 = vmatpush2.bf16.msra.mxu0 0
    %727 = vmatprep.mubr.bf16.mxu0 0
    %728 = vmatmul.mubr.bf16.gmra.mxu0 %v693
    %v729 = vpop.f32.mrf.mxu0
    %v730 = vadd.f32 0.0, %v729
    %v731 = vpop.f32.mrf.mxu0
    %v732 = vpop.f32.mrf.mxu0
    %v733 = vpop.f32.mrf.mxu0
    %734 = vdwg.mxu0
    %736 = vrot.lane.b32.xlu0 %v687, 32
    %v737 = vpop.permute.xlu0 %736
    %v739 = vsel %vm200, %v737, 0
    %741 = vmatprep.subr.bf16.mxu0 0
    %742 = vmatpush1.bf16.msra.mxu0 0
    %743 = vmatprep.subr.bf16.mxu0 0
    %744 = vmatpush1.bf16.msra.mxu0 0
    %745 = vmatprep.subr.bf16.mxu0 0
    %746 = vmatpush1.bf16.msra.mxu0 0
    %747 = vmatprep.subr.bf16.mxu0 0
    %748 = vmatpush1.bf16.msra.mxu0 0
    %749 = vmatprep.subr.bf16.mxu0 0
    %750 = vmatpush1.bf16.msra.mxu0 0
    %751 = vmatprep.subr.bf16.mxu0 0
    %752 = vmatpush1.bf16.msra.mxu0 0
    %753 = vmatprep.subr.bf16.mxu0 0
    %754 = vmatpush1.bf16.msra.mxu0 %v337
    %755 = vmatprep.subr.bf16.mxu0 0
    %756 = vmatpush1.bf16.msra.mxu0 %v336
    %757 = vmatprep.subr.bf16.mxu0 0
    %758 = vmatpush2.bf16.msra.mxu0 0
    %759 = vmatprep.subr.bf16.mxu0 0
    %760 = vmatpush2.bf16.msra.mxu0 0
    %761 = vmatprep.subr.bf16.mxu0 0
    %762 = vmatpush2.bf16.msra.mxu0 0
    %763 = vmatprep.subr.bf16.mxu0 0
    %764 = vmatpush2.bf16.msra.mxu0 0
    %765 = vmatprep.subr.bf16.mxu0 0
    %766 = vmatpush2.bf16.msra.mxu0 0
    %767 = vmatprep.subr.bf16.mxu0 0
    %768 = vmatpush2.bf16.msra.mxu0 0
    %769 = vmatprep.subr.bf16.mxu0 0
    %770 = vmatpush2.bf16.msra.mxu0 0
    %771 = vmatprep.subr.bf16.mxu0 0
    %772 = vmatpush2.bf16.msra.mxu0 0
    %773 = vmatprep.mubr.bf16.mxu0 0
    %774 = vmatmul.mubr.bf16.gmra.mxu0 %v739
    %v775 = vpop.f32.mrf.mxu0
    %v776 = vadd.f32 %v730, %v775
    %v777 = vpop.f32.mrf.mxu0
    %v778 = vpop.f32.mrf.mxu0
    %v779 = vpop.f32.mrf.mxu0
    %780 = vdwg.mxu0
    %v781 = vadd.f32 %v776, %v387
    %v782 = vxor.u32 %v781, 2147483648
    %v783 = vmul.f32 %v782, 1.442695
    %v784 = vpow.pop %v783
    %v785 = vadd.f32 %v784, 1.0
    %v786 = vrcp.pop %v785
    %v787 = vmul.f32 1.0, %v786
    %v788 = vmul.f32 %v787, %v62
    %v789 = vadd.f32 %v788, %v63
    %v790 = vmul.f32 %v789, %v612
    %792 = vrot.lane.b32.xlu0 %v789, 64
    %v793 = vpop.permute.xlu0 %792
    %v795 = vmul.f32 %v789, %v793
    %797 = vrot.lane.b32.xlu0 %v795, 32
    %v798 = vpop.permute.xlu0 %797
    %v800 = vadd.f32 %v790, %v798
    %v801 = vtanh.pop %v800
    %803 = vrot.lane.b32.xlu0 %v801, 64
    %v804 = vpop.permute.xlu0 %803
    %v806 = vmul.f32 %v789, %v804
    %v807 = vsel %vm618, %v806, %v611
    %v808 = vsel %vm618, %v800, %v612
    %vm809 = vcmp.gt.s32.totalorder %v43, 3
    %v810 = vsel %vm809, 1, 0
    %811 = vset.pattern.permute.xlu0 0
    %812 = vperm.xlu0 %811, %v810
    %v813 = vpop.permute.xlu0 %812
    %vm814 = vcmp.eq.s32.totalorder %v813, 1
    %815 = vmatprep.subr.bf16.mxu0 0
    %816 = vmatpush1.bf16.msra.mxu0 0
    %817 = vmatprep.subr.bf16.mxu0 0
    %818 = vmatpush1.bf16.msra.mxu0 0
    %819 = vmatprep.subr.bf16.mxu0 0
    %820 = vmatpush1.bf16.msra.mxu0 0
    %821 = vmatprep.subr.bf16.mxu0 0
    %822 = vmatpush1.bf16.msra.mxu0 0
    %823 = vmatprep.subr.bf16.mxu0 0
    %824 = vmatpush1.bf16.msra.mxu0 0
    %825 = vmatprep.subr.bf16.mxu0 0
    %826 = vmatpush1.bf16.msra.mxu0 0
    %827 = vmatprep.subr.bf16.mxu0 0
    %828 = vmatpush1.bf16.msra.mxu0 %v197
    %829 = vmatprep.subr.bf16.mxu0 0
    %830 = vmatpush1.bf16.msra.mxu0 %v196
    %831 = vmatprep.subr.bf16.mxu0 0
    %832 = vmatpush2.bf16.msra.mxu0 0
    %833 = vmatprep.subr.bf16.mxu0 0
    %834 = vmatpush2.bf16.msra.mxu0 0
    %835 = vmatprep.subr.bf16.mxu0 0
    %836 = vmatpush2.bf16.msra.mxu0 0
    %837 = vmatprep.subr.bf16.mxu0 0
    %838 = vmatpush2.bf16.msra.mxu0 0
    %839 = vmatprep.subr.bf16.mxu0 0
    %840 = vmatpush2.bf16.msra.mxu0 0
    %841 = vmatprep.subr.bf16.mxu0 0
    %842 = vmatpush2.bf16.msra.mxu0 0
    %843 = vmatprep.subr.bf16.mxu0 0
    %844 = vmatpush2.bf16.msra.mxu0 0
    %845 = vmatprep.subr.bf16.mxu0 0
    %846 = vmatpush2.bf16.msra.mxu0 0
    %847 = vmatprep.mubr.bf16.mxu0 0
    %848 = vmatmul.mubr.bf16.gmra.mxu0 %v739
    %v849 = vpop.f32.mrf.mxu0
    %v850 = vadd.f32 0.0, %v849
    %v851 = vpop.f32.mrf.mxu0
    %v852 = vpop.f32.mrf.mxu0
    %v853 = vpop.f32.mrf.mxu0
    %854 = vdwg.mxu0
    %v855 = vadd.f32 %v163, %v850
    %v856 = vxor.u32 %v855, 2147483648
    %v857 = vmul.f32 %v856, 1.442695
    %v858 = vpow.pop %v857
    %v859 = vadd.f32 %v858, 1.0
    %v860 = vrcp.pop %v859
    %v861 = vmul.f32 1.0, %v860
    %v862 = vmul.f32 %v861, %v62
    %v863 = vadd.f32 %v862, %v63
    %v864 = vmul.f32 %v863, %v686
    %866 = vrot.lane.b32.xlu0 %v863, 64
    %v867 = vpop.permute.xlu0 %866
    %v869 = vmul.f32 %v863, %v867
    %871 = vrot.lane.b32.xlu0 %v869, 32
    %v872 = vpop.permute.xlu0 %871
    %v874 = vadd.f32 %v864, %v872
    %v875 = vtanh.pop %v874
    %877 = vrot.lane.b32.xlu0 %v875, 64
    %v878 = vpop.permute.xlu0 %877
    %v880 = vmul.f32 %v863, %v878
    %v881 = vsel %vm814, %v880, %v685
    %v882 = vsel %vm814, %v874, %v686
    %v883 = vpack.c.bf16 %v881, %v881
    %v884 = vpack.c.bf16 %v807, %v807
    %886 = vrot.lane.b32.xlu0 %v884, 32
    %v887 = vpop.permute.xlu0 %886
    %v889 = vsel %vm200, %v887, 0
    %891 = vmatprep.subr.bf16.mxu0 0
    %892 = vmatpush1.bf16.msra.mxu0 0
    %893 = vmatprep.subr.bf16.mxu0 0
    %894 = vmatpush1.bf16.msra.mxu0 0
    %895 = vmatprep.subr.bf16.mxu0 0
    %896 = vmatpush1.bf16.msra.mxu0 0
    %897 = vmatprep.subr.bf16.mxu0 0
    %898 = vmatpush1.bf16.msra.mxu0 0
    %899 = vmatprep.subr.bf16.mxu0 0
    %900 = vmatpush1.bf16.msra.mxu0 0
    %901 = vmatprep.subr.bf16.mxu0 0
    %902 = vmatpush1.bf16.msra.mxu0 0
    %903 = vmatprep.subr.bf16.mxu0 0
    %904 = vmatpush1.bf16.msra.mxu0 %v282
    %905 = vmatprep.subr.bf16.mxu0 0
    %906 = vmatpush1.bf16.msra.mxu0 %v281
    %907 = vmatprep.subr.bf16.mxu0 0
    %908 = vmatpush2.bf16.msra.mxu0 0
    %909 = vmatprep.subr.bf16.mxu0 0
    %910 = vmatpush2.bf16.msra.mxu0 0
    %911 = vmatprep.subr.bf16.mxu0 0
    %912 = vmatpush2.bf16.msra.mxu0 0
    %913 = vmatprep.subr.bf16.mxu0 0
    %914 = vmatpush2.bf16.msra.mxu0 0
    %915 = vmatprep.subr.bf16.mxu0 0
    %916 = vmatpush2.bf16.msra.mxu0 0
    %917 = vmatprep.subr.bf16.mxu0 0
    %918 = vmatpush2.bf16.msra.mxu0 0
    %919 = vmatprep.subr.bf16.mxu0 0
    %920 = vmatpush2.bf16.msra.mxu0 0
    %921 = vmatprep.subr.bf16.mxu0 0
    %922 = vmatpush2.bf16.msra.mxu0 0
    %923 = vmatprep.mubr.bf16.mxu0 0
    %924 = vmatmul.mubr.bf16.gmra.mxu0 %v889
    %v925 = vpop.f32.mrf.mxu0
    %v926 = vadd.f32 0.0, %v925
    %v927 = vpop.f32.mrf.mxu0
    %v928 = vpop.f32.mrf.mxu0
    %v929 = vpop.f32.mrf.mxu0
    %930 = vdwg.mxu0
    %932 = vrot.lane.b32.xlu0 %v883, 32
    %v933 = vpop.permute.xlu0 %932
    %v935 = vsel %vm200, %v933, 0
    %937 = vmatprep.subr.bf16.mxu0 0
    %938 = vmatpush1.bf16.msra.mxu0 0
    %939 = vmatprep.subr.bf16.mxu0 0
    %940 = vmatpush1.bf16.msra.mxu0 0
    %941 = vmatprep.subr.bf16.mxu0 0
    %942 = vmatpush1.bf16.msra.mxu0 0
    %943 = vmatprep.subr.bf16.mxu0 0
    %944 = vmatpush1.bf16.msra.mxu0 0
    %945 = vmatprep.subr.bf16.mxu0 0
    %946 = vmatpush1.bf16.msra.mxu0 0
    %947 = vmatprep.subr.bf16.mxu0 0
    %948 = vmatpush1.bf16.msra.mxu0 0
    %949 = vmatprep.subr.bf16.mxu0 0
    %950 = vmatpush1.bf16.msra.mxu0 %v337
    %951 = vmatprep.subr.bf16.mxu0 0
    %952 = vmatpush1.bf16.msra.mxu0 %v336
    %953 = vmatprep.subr.bf16.mxu0 0
    %954 = vmatpush2.bf16.msra.mxu0 0
    %955 = vmatprep.subr.bf16.mxu0 0
    %956 = vmatpush2.bf16.msra.mxu0 0
    %957 = vmatprep.subr.bf16.mxu0 0
    %958 = vmatpush2.bf16.msra.mxu0 0
    %959 = vmatprep.subr.bf16.mxu0 0
    %960 = vmatpush2.bf16.msra.mxu0 0
    %961 = vmatprep.subr.bf16.mxu0 0
    %962 = vmatpush2.bf16.msra.mxu0 0
    %963 = vmatprep.subr.bf16.mxu0 0
    %964 = vmatpush2.bf16.msra.mxu0 0
    %965 = vmatprep.subr.bf16.mxu0 0
    %966 = vmatpush2.bf16.msra.mxu0 0
    %967 = vmatprep.subr.bf16.mxu0 0
    %968 = vmatpush2.bf16.msra.mxu0 0
    %969 = vmatprep.mubr.bf16.mxu0 0
    %970 = vmatmul.mubr.bf16.gmra.mxu0 %v935
    %v971 = vpop.f32.mrf.mxu0
    %v972 = vadd.f32 %v926, %v971
    %v973 = vpop.f32.mrf.mxu0
    %v974 = vpop.f32.mrf.mxu0
    %v975 = vpop.f32.mrf.mxu0
    %976 = vdwg.mxu0
    %v977 = vadd.f32 %v972, %v387
    %v978 = vxor.u32 %v977, 2147483648
    %v979 = vmul.f32 %v978, 1.442695
    %v980 = vpow.pop %v979
    %v981 = vadd.f32 %v980, 1.0
    %v982 = vrcp.pop %v981
    %v983 = vmul.f32 1.0, %v982
    %v984 = vmul.f32 %v983, %v62
    %v985 = vadd.f32 %v984, %v63
    %v986 = vmul.f32 %v985, %v808
    %988 = vrot.lane.b32.xlu0 %v985, 64
    %v989 = vpop.permute.xlu0 %988
    %v991 = vmul.f32 %v985, %v989
    %993 = vrot.lane.b32.xlu0 %v991, 32
    %v994 = vpop.permute.xlu0 %993
    %v996 = vadd.f32 %v986, %v994
    %v997 = vtanh.pop %v996
    %999 = vrot.lane.b32.xlu0 %v997, 64
    %v1000 = vpop.permute.xlu0 %999
    %v1002 = vmul.f32 %v985, %v1000
    %v1003 = vsel %vm814, %v1002, %v807
    %v1004 = vsel %vm814, %v996, %v808
    %vm1005 = vcmp.gt.s32.totalorder %v43, 4
    %v1006 = vsel %vm1005, 1, 0
    %1007 = vset.pattern.permute.xlu0 0
    %1008 = vperm.xlu0 %1007, %v1006
    %v1009 = vpop.permute.xlu0 %1008
    %vm1010 = vcmp.eq.s32.totalorder %v1009, 1
    %1011 = vmatprep.subr.bf16.mxu0 0
    %1012 = vmatpush1.bf16.msra.mxu0 0
    %1013 = vmatprep.subr.bf16.mxu0 0
    %1014 = vmatpush1.bf16.msra.mxu0 0
    %1015 = vmatprep.subr.bf16.mxu0 0
    %1016 = vmatpush1.bf16.msra.mxu0 0
    %1017 = vmatprep.subr.bf16.mxu0 0
    %1018 = vmatpush1.bf16.msra.mxu0 0
    %1019 = vmatprep.subr.bf16.mxu0 0
    %1020 = vmatpush1.bf16.msra.mxu0 0
    %1021 = vmatprep.subr.bf16.mxu0 0
    %1022 = vmatpush1.bf16.msra.mxu0 0
    %1023 = vmatprep.subr.bf16.mxu0 0
    %1024 = vmatpush1.bf16.msra.mxu0 %v197
    %1025 = vmatprep.subr.bf16.mxu0 0
    %1026 = vmatpush1.bf16.msra.mxu0 %v196
    %1027 = vmatprep.subr.bf16.mxu0 0
    %1028 = vmatpush2.bf16.msra.mxu0 0
    %1029 = vmatprep.subr.bf16.mxu0 0
    %1030 = vmatpush2.bf16.msra.mxu0 0
    %1031 = vmatprep.subr.bf16.mxu0 0
    %1032 = vmatpush2.bf16.msra.mxu0 0
    %1033 = vmatprep.subr.bf16.mxu0 0
    %1034 = vmatpush2.bf16.msra.mxu0 0
    %1035 = vmatprep.subr.bf16.mxu0 0
    %1036 = vmatpush2.bf16.msra.mxu0 0
    %1037 = vmatprep.subr.bf16.mxu0 0
    %1038 = vmatpush2.bf16.msra.mxu0 0
    %1039 = vmatprep.subr.bf16.mxu0 0
    %1040 = vmatpush2.bf16.msra.mxu0 0
    %1041 = vmatprep.subr.bf16.mxu0 0
    %1042 = vmatpush2.bf16.msra.mxu0 0
    %1043 = vmatprep.mubr.bf16.mxu0 0
    %1044 = vmatmul.mubr.bf16.gmra.mxu0 %v935
    %v1045 = vpop.f32.mrf.mxu0
    %v1046 = vadd.f32 0.0, %v1045
    %v1047 = vpop.f32.mrf.mxu0
    %v1048 = vpop.f32.mrf.mxu0
    %v1049 = vpop.f32.mrf.mxu0
    %1050 = vdwg.mxu0
    %v1051 = vadd.f32 %v168, %v1046
    %v1052 = vxor.u32 %v1051, 2147483648
    %v1053 = vmul.f32 %v1052, 1.442695
    %v1054 = vpow.pop %v1053
    %v1055 = vadd.f32 %v1054, 1.0
    %v1056 = vrcp.pop %v1055
    %v1057 = vmul.f32 1.0, %v1056
    %v1058 = vmul.f32 %v1057, %v62
    %v1059 = vadd.f32 %v1058, %v63
    %v1060 = vmul.f32 %v1059, %v882
    %1062 = vrot.lane.b32.xlu0 %v1059, 64
    %v1063 = vpop.permute.xlu0 %1062
    %v1065 = vmul.f32 %v1059, %v1063
    %1067 = vrot.lane.b32.xlu0 %v1065, 32
    %v1068 = vpop.permute.xlu0 %1067
    %v1070 = vadd.f32 %v1060, %v1068
    %v1071 = vtanh.pop %v1070
    %1073 = vrot.lane.b32.xlu0 %v1071, 64
    %v1074 = vpop.permute.xlu0 %1073
    %v1076 = vmul.f32 %v1059, %v1074
    %v1077 = vsel %vm1010, %v1076, %v881
    %v1078 = vsel %vm1010, %v1070, %v882
    %v1079 = vpack.c.bf16 %v1077, %v1077
    %v1080 = vpack.c.bf16 %v1003, %v1003
    %1082 = vrot.lane.b32.xlu0 %v1080, 32
    %v1083 = vpop.permute.xlu0 %1082
    %v1085 = vsel %vm200, %v1083, 0
    %1087 = vmatprep.subr.bf16.mxu0 0
    %1088 = vmatpush1.bf16.msra.mxu0 0
    %1089 = vmatprep.subr.bf16.mxu0 0
    %1090 = vmatpush1.bf16.msra.mxu0 0
    %1091 = vmatprep.subr.bf16.mxu0 0
    %1092 = vmatpush1.bf16.msra.mxu0 0
    %1093 = vmatprep.subr.bf16.mxu0 0
    %1094 = vmatpush1.bf16.msra.mxu0 0
    %1095 = vmatprep.subr.bf16.mxu0 0
    %1096 = vmatpush1.bf16.msra.mxu0 0
    %1097 = vmatprep.subr.bf16.mxu0 0
    %1098 = vmatpush1.bf16.msra.mxu0 0
    %1099 = vmatprep.subr.bf16.mxu0 0
    %1100 = vmatpush1.bf16.msra.mxu0 %v282
    %1101 = vmatprep.subr.bf16.mxu0 0
    %1102 = vmatpush1.bf16.msra.mxu0 %v281
    %1103 = vmatprep.subr.bf16.mxu0 0
    %1104 = vmatpush2.bf16.msra.mxu0 0
    %1105 = vmatprep.subr.bf16.mxu0 0
    %1106 = vmatpush2.bf16.msra.mxu0 0
    %1107 = vmatprep.subr.bf16.mxu0 0
    %1108 = vmatpush2.bf16.msra.mxu0 0
    %1109 = vmatprep.subr.bf16.mxu0 0
    %1110 = vmatpush2.bf16.msra.mxu0 0
    %1111 = vmatprep.subr.bf16.mxu0 0
    %1112 = vmatpush2.bf16.msra.mxu0 0
    %1113 = vmatprep.subr.bf16.mxu0 0
    %1114 = vmatpush2.bf16.msra.mxu0 0
    %1115 = vmatprep.subr.bf16.mxu0 0
    %1116 = vmatpush2.bf16.msra.mxu0 0
    %1117 = vmatprep.subr.bf16.mxu0 0
    %1118 = vmatpush2.bf16.msra.mxu0 0
    %1119 = vmatprep.mubr.bf16.mxu0 0
    %1120 = vmatmul.mubr.bf16.gmra.mxu0 %v1085
    %v1121 = vpop.f32.mrf.mxu0
    %v1122 = vadd.f32 0.0, %v1121
    %v1123 = vpop.f32.mrf.mxu0
    %v1124 = vpop.f32.mrf.mxu0
    %v1125 = vpop.f32.mrf.mxu0
    %1126 = vdwg.mxu0
    %1128 = vrot.lane.b32.xlu0 %v1079, 32
    %v1129 = vpop.permute.xlu0 %1128
    %v1131 = vsel %vm200, %v1129, 0
    %1133 = vmatprep.subr.bf16.mxu0 0
    %1134 = vmatpush1.bf16.msra.mxu0 0
    %1135 = vmatprep.subr.bf16.mxu0 0
    %1136 = vmatpush1.bf16.msra.mxu0 0
    %1137 = vmatprep.subr.bf16.mxu0 0
    %1138 = vmatpush1.bf16.msra.mxu0 0
    %1139 = vmatprep.subr.bf16.mxu0 0
    %1140 = vmatpush1.bf16.msra.mxu0 0
    %1141 = vmatprep.subr.bf16.mxu0 0
    %1142 = vmatpush1.bf16.msra.mxu0 0
    %1143 = vmatprep.subr.bf16.mxu0 0
    %1144 = vmatpush1.bf16.msra.mxu0 0
    %1145 = vmatprep.subr.bf16.mxu0 0
    %1146 = vmatpush1.bf16.msra.mxu0 %v337
    %1147 = vmatprep.subr.bf16.mxu0 0
    %1148 = vmatpush1.bf16.msra.mxu0 %v336
    %1149 = vmatprep.subr.bf16.mxu0 0
    %1150 = vmatpush2.bf16.msra.mxu0 0
    %1151 = vmatprep.subr.bf16.mxu0 0
    %1152 = vmatpush2.bf16.msra.mxu0 0
    %1153 = vmatprep.subr.bf16.mxu0 0
    %1154 = vmatpush2.bf16.msra.mxu0 0
    %1155 = vmatprep.subr.bf16.mxu0 0
    %1156 = vmatpush2.bf16.msra.mxu0 0
    %1157 = vmatprep.subr.bf16.mxu0 0
    %1158 = vmatpush2.bf16.msra.mxu0 0
    %1159 = vmatprep.subr.bf16.mxu0 0
    %1160 = vmatpush2.bf16.msra.mxu0 0
    %1161 = vmatprep.subr.bf16.mxu0 0
    %1162 = vmatpush2.bf16.msra.mxu0 0
    %1163 = vmatprep.subr.bf16.mxu0 0
    %1164 = vmatpush2.bf16.msra.mxu0 0
    %1165 = vmatprep.mubr.bf16.mxu0 0
    %1166 = vmatmul.mubr.bf16.gmra.mxu0 %v1131
    %v1167 = vpop.f32.mrf.mxu0
    %v1168 = vadd.f32 %v1122, %v1167
    %v1169 = vpop.f32.mrf.mxu0
    %v1170 = vpop.f32.mrf.mxu0
    %v1171 = vpop.f32.mrf.mxu0
    %1172 = vdwg.mxu0
    %v1173 = vadd.f32 %v1168, %v387
    %v1174 = vxor.u32 %v1173, 2147483648
    %v1175 = vmul.f32 %v1174, 1.442695
    %v1176 = vpow.pop %v1175
    %v1177 = vadd.f32 %v1176, 1.0
    %v1178 = vrcp.pop %v1177
    %v1179 = vmul.f32 1.0, %v1178
    %v1180 = vmul.f32 %v1179, %v62
    %v1181 = vadd.f32 %v1180, %v63
    %v1182 = vmul.f32 %v1181, %v1004
    %1184 = vrot.lane.b32.xlu0 %v1181, 64
    %v1185 = vpop.permute.xlu0 %1184
    %v1187 = vmul.f32 %v1181, %v1185
    %1189 = vrot.lane.b32.xlu0 %v1187, 32
    %v1190 = vpop.permute.xlu0 %1189
    %v1192 = vadd.f32 %v1182, %v1190
    %v1193 = vtanh.pop %v1192
    %1195 = vrot.lane.b32.xlu0 %v1193, 64
    %v1196 = vpop.permute.xlu0 %1195
    %v1198 = vmul.f32 %v1181, %v1196
    %v1199 = vsel %vm1010, %v1198, %v1003
    %v1200 = vsel %vm1010, %v1192, %v1004
    %vm1201 = vcmp.gt.s32.totalorder %v43, 5
    %v1202 = vsel %vm1201, 1, 0
    %1203 = vset.pattern.permute.xlu0 0
    %1204 = vperm.xlu0 %1203, %v1202
    %v1205 = vpop.permute.xlu0 %1204
    %vm1206 = vcmp.eq.s32.totalorder %v1205, 1
    %1207 = vmatprep.subr.bf16.mxu0 0
    %1208 = vmatpush1.bf16.msra.mxu0 0
    %1209 = vmatprep.subr.bf16.mxu0 0
    %1210 = vmatpush1.bf16.msra.mxu0 0
    %1211 = vmatprep.subr.bf16.mxu0 0
    %1212 = vmatpush1.bf16.msra.mxu0 0
    %1213 = vmatprep.subr.bf16.mxu0 0
    %1214 = vmatpush1.bf16.msra.mxu0 0
    %1215 = vmatprep.subr.bf16.mxu0 0
    %1216 = vmatpush1.bf16.msra.mxu0 0
    %1217 = vmatprep.subr.bf16.mxu0 0
    %1218 = vmatpush1.bf16.msra.mxu0 0
    %1219 = vmatprep.subr.bf16.mxu0 0
    %1220 = vmatpush1.bf16.msra.mxu0 %v197
    %1221 = vmatprep.subr.bf16.mxu0 0
    %1222 = vmatpush1.bf16.msra.mxu0 %v196
    %1223 = vmatprep.subr.bf16.mxu0 0
    %1224 = vmatpush2.bf16.msra.mxu0 0
    %1225 = vmatprep.subr.bf16.mxu0 0
    %1226 = vmatpush2.bf16.msra.mxu0 0
    %1227 = vmatprep.subr.bf16.mxu0 0
    %1228 = vmatpush2.bf16.msra.mxu0 0
    %1229 = vmatprep.subr.bf16.mxu0 0
    %1230 = vmatpush2.bf16.msra.mxu0 0
    %1231 = vmatprep.subr.bf16.mxu0 0
    %1232 = vmatpush2.bf16.msra.mxu0 0
    %1233 = vmatprep.subr.bf16.mxu0 0
    %1234 = vmatpush2.bf16.msra.mxu0 0
    %1235 = vmatprep.subr.bf16.mxu0 0
    %1236 = vmatpush2.bf16.msra.mxu0 0
    %1237 = vmatprep.subr.bf16.mxu0 0
    %1238 = vmatpush2.bf16.msra.mxu0 0
    %1239 = vmatprep.mubr.bf16.mxu0 0
    %1240 = vmatmul.mubr.bf16.gmra.mxu0 %v1131
    %v1241 = vpop.f32.mrf.mxu0
    %v1242 = vadd.f32 0.0, %v1241
    %v1243 = vpop.f32.mrf.mxu0
    %v1244 = vpop.f32.mrf.mxu0
    %v1245 = vpop.f32.mrf.mxu0
    %1246 = vdwg.mxu0
    %v1247 = vadd.f32 %v171, %v1242
    %v1248 = vxor.u32 %v1247, 2147483648
    %v1249 = vmul.f32 %v1248, 1.442695
    %v1250 = vpow.pop %v1249
    %v1251 = vadd.f32 %v1250, 1.0
    %v1252 = vrcp.pop %v1251
    %v1253 = vmul.f32 1.0, %v1252
    %v1254 = vmul.f32 %v1253, %v62
    %v1255 = vadd.f32 %v1254, %v63
    %v1256 = vmul.f32 %v1255, %v1078
    %1258 = vrot.lane.b32.xlu0 %v1255, 64
    %v1259 = vpop.permute.xlu0 %1258
    %v1261 = vmul.f32 %v1255, %v1259
    %1263 = vrot.lane.b32.xlu0 %v1261, 32
    %v1264 = vpop.permute.xlu0 %1263
    %v1266 = vadd.f32 %v1256, %v1264
    %v1267 = vtanh.pop %v1266
    %1269 = vrot.lane.b32.xlu0 %v1267, 64
    %v1270 = vpop.permute.xlu0 %1269
    %v1272 = vmul.f32 %v1255, %v1270
    %v1273 = vsel %vm1206, %v1272, %v1077
    %v1274 = vsel %vm1206, %v1266, %v1078
    %v1275 = vpack.c.bf16 %v1273, %v1273
    %v1276 = vpack.c.bf16 %v1199, %v1199
    %1278 = vrot.lane.b32.xlu0 %v1276, 32
    %v1279 = vpop.permute.xlu0 %1278
    %v1281 = vsel %vm200, %v1279, 0
    %1283 = vmatprep.subr.bf16.mxu0 0
    %1284 = vmatpush1.bf16.msra.mxu0 0
    %1285 = vmatprep.subr.bf16.mxu0 0
    %1286 = vmatpush1.bf16.msra.mxu0 0
    %1287 = vmatprep.subr.bf16.mxu0 0
    %1288 = vmatpush1.bf16.msra.mxu0 0
    %1289 = vmatprep.subr.bf16.mxu0 0
    %1290 = vmatpush1.bf16.msra.mxu0 0
    %1291 = vmatprep.subr.bf16.mxu0 0
    %1292 = vmatpush1.bf16.msra.mxu0 0
    %1293 = vmatprep.subr.bf16.mxu0 0
    %1294 = vmatpush1.bf16.msra.mxu0 0
    %1295 = vmatprep.subr.bf16.mxu0 0
    %1296 = vmatpush1.bf16.msra.mxu0 %v282
    %1297 = vmatprep.subr.bf16.mxu0 0
    %1298 = vmatpush1.bf16.msra.mxu0 %v281
    %1299 = vmatprep.subr.bf16.mxu0 0
    %1300 = vmatpush2.bf16.msra.mxu0 0
    %1301 = vmatprep.subr.bf16.mxu0 0
    %1302 = vmatpush2.bf16.msra.mxu0 0
    %1303 = vmatprep.subr.bf16.mxu0 0
    %1304 = vmatpush2.bf16.msra.mxu0 0
    %1305 = vmatprep.subr.bf16.mxu0 0
    %1306 = vmatpush2.bf16.msra.mxu0 0
    %1307 = vmatprep.subr.bf16.mxu0 0
    %1308 = vmatpush2.bf16.msra.mxu0 0
    %1309 = vmatprep.subr.bf16.mxu0 0
    %1310 = vmatpush2.bf16.msra.mxu0 0
    %1311 = vmatprep.subr.bf16.mxu0 0
    %1312 = vmatpush2.bf16.msra.mxu0 0
    %1313 = vmatprep.subr.bf16.mxu0 0
    %1314 = vmatpush2.bf16.msra.mxu0 0
    %1315 = vmatprep.mubr.bf16.mxu0 0
    %1316 = vmatmul.mubr.bf16.gmra.mxu0 %v1281
    %v1317 = vpop.f32.mrf.mxu0
    %v1318 = vadd.f32 0.0, %v1317
    %v1319 = vpop.f32.mrf.mxu0
    %v1320 = vpop.f32.mrf.mxu0
    %v1321 = vpop.f32.mrf.mxu0
    %1322 = vdwg.mxu0
    %1324 = vrot.lane.b32.xlu0 %v1275, 32
    %v1325 = vpop.permute.xlu0 %1324
    %v1327 = vsel %vm200, %v1325, 0
    %1329 = vmatprep.subr.bf16.mxu0 0
    %1330 = vmatpush1.bf16.msra.mxu0 0
    %1331 = vmatprep.subr.bf16.mxu0 0
    %1332 = vmatpush1.bf16.msra.mxu0 0
    %1333 = vmatprep.subr.bf16.mxu0 0
    %1334 = vmatpush1.bf16.msra.mxu0 0
    %1335 = vmatprep.subr.bf16.mxu0 0
    %1336 = vmatpush1.bf16.msra.mxu0 0
    %1337 = vmatprep.subr.bf16.mxu0 0
    %1338 = vmatpush1.bf16.msra.mxu0 0
    %1339 = vmatprep.subr.bf16.mxu0 0
    %1340 = vmatpush1.bf16.msra.mxu0 0
    %1341 = vmatprep.subr.bf16.mxu0 0
    %1342 = vmatpush1.bf16.msra.mxu0 %v337
    %1343 = vmatprep.subr.bf16.mxu0 0
    %1344 = vmatpush1.bf16.msra.mxu0 %v336
    %1345 = vmatprep.subr.bf16.mxu0 0
    %1346 = vmatpush2.bf16.msra.mxu0 0
    %1347 = vmatprep.subr.bf16.mxu0 0
    %1348 = vmatpush2.bf16.msra.mxu0 0
    %1349 = vmatprep.subr.bf16.mxu0 0
    %1350 = vmatpush2.bf16.msra.mxu0 0
    %1351 = vmatprep.subr.bf16.mxu0 0
    %1352 = vmatpush2.bf16.msra.mxu0 0
    %1353 = vmatprep.subr.bf16.mxu0 0
    %1354 = vmatpush2.bf16.msra.mxu0 0
    %1355 = vmatprep.subr.bf16.mxu0 0
    %1356 = vmatpush2.bf16.msra.mxu0 0
    %1357 = vmatprep.subr.bf16.mxu0 0
    %1358 = vmatpush2.bf16.msra.mxu0 0
    %1359 = vmatprep.subr.bf16.mxu0 0
    %1360 = vmatpush2.bf16.msra.mxu0 0
    %1361 = vmatprep.mubr.bf16.mxu0 0
    %1362 = vmatmul.mubr.bf16.gmra.mxu0 %v1327
    %v1363 = vpop.f32.mrf.mxu0
    %v1364 = vadd.f32 %v1318, %v1363
    %v1365 = vpop.f32.mrf.mxu0
    %v1366 = vpop.f32.mrf.mxu0
    %v1367 = vpop.f32.mrf.mxu0
    %1368 = vdwg.mxu0
    %v1369 = vadd.f32 %v1364, %v387
    %v1370 = vxor.u32 %v1369, 2147483648
    %v1371 = vmul.f32 %v1370, 1.442695
    %v1372 = vpow.pop %v1371
    %v1373 = vadd.f32 %v1372, 1.0
    %v1374 = vrcp.pop %v1373
    %v1375 = vmul.f32 1.0, %v1374
    %v1376 = vmul.f32 %v1375, %v62
    %v1377 = vadd.f32 %v1376, %v63
    %v1378 = vmul.f32 %v1377, %v1200
    %1380 = vrot.lane.b32.xlu0 %v1377, 64
    %v1381 = vpop.permute.xlu0 %1380
    %v1383 = vmul.f32 %v1377, %v1381
    %1385 = vrot.lane.b32.xlu0 %v1383, 32
    %v1386 = vpop.permute.xlu0 %1385
    %v1388 = vadd.f32 %v1378, %v1386
    %v1389 = vtanh.pop %v1388
    %1391 = vrot.lane.b32.xlu0 %v1389, 64
    %v1392 = vpop.permute.xlu0 %1391
    %v1394 = vmul.f32 %v1377, %v1392
    %v1395 = vsel %vm1206, %v1394, %v1199
    %v1396 = vsel %vm1206, %v1388, %v1200
    %vm1397 = vcmp.gt.s32.totalorder %v43, 6
    %v1398 = vsel %vm1397, 1, 0
    %1399 = vset.pattern.permute.xlu0 0
    %1400 = vperm.xlu0 %1399, %v1398
    %v1401 = vpop.permute.xlu0 %1400
    %vm1402 = vcmp.eq.s32.totalorder %v1401, 1
    %1403 = vmatprep.subr.bf16.mxu0 0
    %1404 = vmatpush1.bf16.msra.mxu0 0
    %1405 = vmatprep.subr.bf16.mxu0 0
    %1406 = vmatpush1.bf16.msra.mxu0 0
    %1407 = vmatprep.subr.bf16.mxu0 0
    %1408 = vmatpush1.bf16.msra.mxu0 0
    %1409 = vmatprep.subr.bf16.mxu0 0
    %1410 = vmatpush1.bf16.msra.mxu0 0
    %1411 = vmatprep.subr.bf16.mxu0 0
    %1412 = vmatpush1.bf16.msra.mxu0 0
    %1413 = vmatprep.subr.bf16.mxu0 0
    %1414 = vmatpush1.bf16.msra.mxu0 0
    %1415 = vmatprep.subr.bf16.mxu0 0
    %1416 = vmatpush1.bf16.msra.mxu0 %v197
    %1417 = vmatprep.subr.bf16.mxu0 0
    %1418 = vmatpush1.bf16.msra.mxu0 %v196
    %1419 = vmatprep.subr.bf16.mxu0 0
    %1420 = vmatpush2.bf16.msra.mxu0 0
    %1421 = vmatprep.subr.bf16.mxu0 0
    %1422 = vmatpush2.bf16.msra.mxu0 0
    %1423 = vmatprep.subr.bf16.mxu0 0
    %1424 = vmatpush2.bf16.msra.mxu0 0
    %1425 = vmatprep.subr.bf16.mxu0 0
    %1426 = vmatpush2.bf16.msra.mxu0 0
    %1427 = vmatprep.subr.bf16.mxu0 0
    %1428 = vmatpush2.bf16.msra.mxu0 0
    %1429 = vmatprep.subr.bf16.mxu0 0
    %1430 = vmatpush2.bf16.msra.mxu0 0
    %1431 = vmatprep.subr.bf16.mxu0 0
    %1432 = vmatpush2.bf16.msra.mxu0 0
    %1433 = vmatprep.subr.bf16.mxu0 0
    %1434 = vmatpush2.bf16.msra.mxu0 0
    %1435 = vmatprep.mubr.bf16.mxu0 0
    %1436 = vmatmul.mubr.bf16.gmra.mxu0 %v1327
    %v1437 = vpop.f32.mrf.mxu0
    %v1438 = vadd.f32 0.0, %v1437
    %v1439 = vpop.f32.mrf.mxu0
    %v1440 = vpop.f32.mrf.mxu0
    %v1441 = vpop.f32.mrf.mxu0
    %1442 = vdwg.mxu0
    %v1443 = vadd.f32 %v176, %v1438
    %v1444 = vxor.u32 %v1443, 2147483648
    %v1445 = vmul.f32 %v1444, 1.442695
    %v1446 = vpow.pop %v1445
    %v1447 = vadd.f32 %v1446, 1.0
    %v1448 = vrcp.pop %v1447
    %v1449 = vmul.f32 1.0, %v1448
    %v1450 = vmul.f32 %v1449, %v62
    %v1451 = vadd.f32 %v1450, %v63
    %v1452 = vmul.f32 %v1451, %v1274
    %1454 = vrot.lane.b32.xlu0 %v1451, 64
    %v1455 = vpop.permute.xlu0 %1454
    %v1457 = vmul.f32 %v1451, %v1455
    %1459 = vrot.lane.b32.xlu0 %v1457, 32
    %v1460 = vpop.permute.xlu0 %1459
    %v1462 = vadd.f32 %v1452, %v1460
    %v1463 = vtanh.pop %v1462
    %1465 = vrot.lane.b32.xlu0 %v1463, 64
    %v1466 = vpop.permute.xlu0 %1465
    %v1468 = vmul.f32 %v1451, %v1466
    %v1469 = vsel %vm1402, %v1468, %v1273
    %v1470 = vsel %vm1402, %v1462, %v1274
    %v1471 = vpack.c.bf16 %v1469, %v1469
    %v1472 = vpack.c.bf16 %v1395, %v1395
    %1474 = vrot.lane.b32.xlu0 %v1472, 32
    %v1475 = vpop.permute.xlu0 %1474
    %v1477 = vsel %vm200, %v1475, 0
    %1479 = vmatprep.subr.bf16.mxu0 0
    %1480 = vmatpush1.bf16.msra.mxu0 0
    %1481 = vmatprep.subr.bf16.mxu0 0
    %1482 = vmatpush1.bf16.msra.mxu0 0
    %1483 = vmatprep.subr.bf16.mxu0 0
    %1484 = vmatpush1.bf16.msra.mxu0 0
    %1485 = vmatprep.subr.bf16.mxu0 0
    %1486 = vmatpush1.bf16.msra.mxu0 0
    %1487 = vmatprep.subr.bf16.mxu0 0
    %1488 = vmatpush1.bf16.msra.mxu0 0
    %1489 = vmatprep.subr.bf16.mxu0 0
    %1490 = vmatpush1.bf16.msra.mxu0 0
    %1491 = vmatprep.subr.bf16.mxu0 0
    %1492 = vmatpush1.bf16.msra.mxu0 %v282
    %1493 = vmatprep.subr.bf16.mxu0 0
    %1494 = vmatpush1.bf16.msra.mxu0 %v281
    %1495 = vmatprep.subr.bf16.mxu0 0
    %1496 = vmatpush2.bf16.msra.mxu0 0
    %1497 = vmatprep.subr.bf16.mxu0 0
    %1498 = vmatpush2.bf16.msra.mxu0 0
    %1499 = vmatprep.subr.bf16.mxu0 0
    %1500 = vmatpush2.bf16.msra.mxu0 0
    %1501 = vmatprep.subr.bf16.mxu0 0
    %1502 = vmatpush2.bf16.msra.mxu0 0
    %1503 = vmatprep.subr.bf16.mxu0 0
    %1504 = vmatpush2.bf16.msra.mxu0 0
    %1505 = vmatprep.subr.bf16.mxu0 0
    %1506 = vmatpush2.bf16.msra.mxu0 0
    %1507 = vmatprep.subr.bf16.mxu0 0
    %1508 = vmatpush2.bf16.msra.mxu0 0
    %1509 = vmatprep.subr.bf16.mxu0 0
    %1510 = vmatpush2.bf16.msra.mxu0 0
    %1511 = vmatprep.mubr.bf16.mxu0 0
    %1512 = vmatmul.mubr.bf16.gmra.mxu0 %v1477
    %v1513 = vpop.f32.mrf.mxu0
    %v1514 = vadd.f32 0.0, %v1513
    %v1515 = vpop.f32.mrf.mxu0
    %v1516 = vpop.f32.mrf.mxu0
    %v1517 = vpop.f32.mrf.mxu0
    %1518 = vdwg.mxu0
    %1520 = vrot.lane.b32.xlu0 %v1471, 32
    %v1521 = vpop.permute.xlu0 %1520
    %v1523 = vsel %vm200, %v1521, 0
    %1525 = vmatprep.subr.bf16.mxu0 0
    %1526 = vmatpush1.bf16.msra.mxu0 0
    %1527 = vmatprep.subr.bf16.mxu0 0
    %1528 = vmatpush1.bf16.msra.mxu0 0
    %1529 = vmatprep.subr.bf16.mxu0 0
    %1530 = vmatpush1.bf16.msra.mxu0 0
    %1531 = vmatprep.subr.bf16.mxu0 0
    %1532 = vmatpush1.bf16.msra.mxu0 0
    %1533 = vmatprep.subr.bf16.mxu0 0
    %1534 = vmatpush1.bf16.msra.mxu0 0
    %1535 = vmatprep.subr.bf16.mxu0 0
    %1536 = vmatpush1.bf16.msra.mxu0 0
    %1537 = vmatprep.subr.bf16.mxu0 0
    %1538 = vmatpush1.bf16.msra.mxu0 %v337
    %1539 = vmatprep.subr.bf16.mxu0 0
    %1540 = vmatpush1.bf16.msra.mxu0 %v336
    %1541 = vmatprep.subr.bf16.mxu0 0
    %1542 = vmatpush2.bf16.msra.mxu0 0
    %1543 = vmatprep.subr.bf16.mxu0 0
    %1544 = vmatpush2.bf16.msra.mxu0 0
    %1545 = vmatprep.subr.bf16.mxu0 0
    %1546 = vmatpush2.bf16.msra.mxu0 0
    %1547 = vmatprep.subr.bf16.mxu0 0
    %1548 = vmatpush2.bf16.msra.mxu0 0
    %1549 = vmatprep.subr.bf16.mxu0 0
    %1550 = vmatpush2.bf16.msra.mxu0 0
    %1551 = vmatprep.subr.bf16.mxu0 0
    %1552 = vmatpush2.bf16.msra.mxu0 0
    %1553 = vmatprep.subr.bf16.mxu0 0
    %1554 = vmatpush2.bf16.msra.mxu0 0
    %1555 = vmatprep.subr.bf16.mxu0 0
    %1556 = vmatpush2.bf16.msra.mxu0 0
    %1557 = vmatprep.mubr.bf16.mxu0 0
    %1558 = vmatmul.mubr.bf16.gmra.mxu0 %v1523
    %v1559 = vpop.f32.mrf.mxu0
    %v1560 = vadd.f32 %v1514, %v1559
    %v1561 = vpop.f32.mrf.mxu0
    %v1562 = vpop.f32.mrf.mxu0
    %v1563 = vpop.f32.mrf.mxu0
    %1564 = vdwg.mxu0
    %v1565 = vadd.f32 %v1560, %v387
    %v1566 = vxor.u32 %v1565, 2147483648
    %v1567 = vmul.f32 %v1566, 1.442695
    %v1568 = vpow.pop %v1567
    %v1569 = vadd.f32 %v1568, 1.0
    %v1570 = vrcp.pop %v1569
    %v1571 = vmul.f32 1.0, %v1570
    %v1572 = vmul.f32 %v1571, %v62
    %v1573 = vadd.f32 %v1572, %v63
    %v1574 = vmul.f32 %v1573, %v1396
    %1576 = vrot.lane.b32.xlu0 %v1573, 64
    %v1577 = vpop.permute.xlu0 %1576
    %v1579 = vmul.f32 %v1573, %v1577
    %1581 = vrot.lane.b32.xlu0 %v1579, 32
    %v1582 = vpop.permute.xlu0 %1581
    %v1584 = vadd.f32 %v1574, %v1582
    %v1585 = vtanh.pop %v1584
    %1587 = vrot.lane.b32.xlu0 %v1585, 64
    %v1588 = vpop.permute.xlu0 %1587
    %v1590 = vmul.f32 %v1573, %v1588
    %v1591 = vsel %vm1402, %v1590, %v1395
    %v1592 = vsel %vm1402, %v1584, %v1396
    %vm1593 = vcmp.gt.s32.totalorder %v43, 7
    %v1594 = vsel %vm1593, 1, 0
    %1595 = vset.pattern.permute.xlu0 0
    %1596 = vperm.xlu0 %1595, %v1594
    %v1597 = vpop.permute.xlu0 %1596
    %vm1598 = vcmp.eq.s32.totalorder %v1597, 1
    %1599 = vmatprep.subr.bf16.mxu0 0
    %1600 = vmatpush1.bf16.msra.mxu0 0
    %1601 = vmatprep.subr.bf16.mxu0 0
    %1602 = vmatpush1.bf16.msra.mxu0 0
    %1603 = vmatprep.subr.bf16.mxu0 0
    %1604 = vmatpush1.bf16.msra.mxu0 0
    %1605 = vmatprep.subr.bf16.mxu0 0
    %1606 = vmatpush1.bf16.msra.mxu0 0
    %1607 = vmatprep.subr.bf16.mxu0 0
    %1608 = vmatpush1.bf16.msra.mxu0 0
    %1609 = vmatprep.subr.bf16.mxu0 0
    %1610 = vmatpush1.bf16.msra.mxu0 0
    %1611 = vmatprep.subr.bf16.mxu0 0
    %1612 = vmatpush1.bf16.msra.mxu0 %v197
    %1613 = vmatprep.subr.bf16.mxu0 0
    %1614 = vmatpush1.bf16.msra.mxu0 %v196
    %1615 = vmatprep.subr.bf16.mxu0 0
    %1616 = vmatpush2.bf16.msra.mxu0 0
    %1617 = vmatprep.subr.bf16.mxu0 0
    %1618 = vmatpush2.bf16.msra.mxu0 0
    %1619 = vmatprep.subr.bf16.mxu0 0
    %1620 = vmatpush2.bf16.msra.mxu0 0
    %1621 = vmatprep.subr.bf16.mxu0 0
    %1622 = vmatpush2.bf16.msra.mxu0 0
    %1623 = vmatprep.subr.bf16.mxu0 0
    %1624 = vmatpush2.bf16.msra.mxu0 0
    %1625 = vmatprep.subr.bf16.mxu0 0
    %1626 = vmatpush2.bf16.msra.mxu0 0
    %1627 = vmatprep.subr.bf16.mxu0 0
    %1628 = vmatpush2.bf16.msra.mxu0 0
    %1629 = vmatprep.subr.bf16.mxu0 0
    %1630 = vmatpush2.bf16.msra.mxu0 0
    %1631 = vmatprep.mubr.bf16.mxu0 0
    %1632 = vmatmul.mubr.bf16.gmra.mxu0 %v1523
    %v1633 = vpop.f32.mrf.mxu0
    %v1634 = vadd.f32 0.0, %v1633
    %v1635 = vpop.f32.mrf.mxu0
    %v1636 = vpop.f32.mrf.mxu0
    %v1637 = vpop.f32.mrf.mxu0
    %1638 = vdwg.mxu0
    %v1639 = vadd.f32 %v179, %v1634
    %v1640 = vxor.u32 %v1639, 2147483648
    %v1641 = vmul.f32 %v1640, 1.442695
    %v1642 = vpow.pop %v1641
    %v1643 = vadd.f32 %v1642, 1.0
    %v1644 = vrcp.pop %v1643
    %v1645 = vmul.f32 1.0, %v1644
    %v1646 = vmul.f32 %v1645, %v62
    %v1647 = vadd.f32 %v1646, %v63
    %v1648 = vmul.f32 %v1647, %v1470
    %1650 = vrot.lane.b32.xlu0 %v1647, 64
    %v1651 = vpop.permute.xlu0 %1650
    %v1653 = vmul.f32 %v1647, %v1651
    %1655 = vrot.lane.b32.xlu0 %v1653, 32
    %v1656 = vpop.permute.xlu0 %1655
    %v1658 = vadd.f32 %v1648, %v1656
    %v1659 = vtanh.pop %v1658
    %1661 = vrot.lane.b32.xlu0 %v1659, 64
    %v1662 = vpop.permute.xlu0 %1661
    %v1664 = vmul.f32 %v1647, %v1662
    %v1665 = vsel %vm1598, %v1664, %v1469
    %v1666 = vpack.c.bf16 %v1665, %v1665
    %v1667 = vpack.c.bf16 %v1591, %v1591
    %1669 = vrot.lane.b32.xlu0 %v1667, 32
    %v1670 = vpop.permute.xlu0 %1669
    %v1672 = vsel %vm200, %v1670, 0
    %1674 = vmatprep.subr.bf16.mxu0 0
    %1675 = vmatpush1.bf16.msra.mxu0 0
    %1676 = vmatprep.subr.bf16.mxu0 0
    %1677 = vmatpush1.bf16.msra.mxu0 0
    %1678 = vmatprep.subr.bf16.mxu0 0
    %1679 = vmatpush1.bf16.msra.mxu0 0
    %1680 = vmatprep.subr.bf16.mxu0 0
    %1681 = vmatpush1.bf16.msra.mxu0 0
    %1682 = vmatprep.subr.bf16.mxu0 0
    %1683 = vmatpush1.bf16.msra.mxu0 0
    %1684 = vmatprep.subr.bf16.mxu0 0
    %1685 = vmatpush1.bf16.msra.mxu0 0
    %1686 = vmatprep.subr.bf16.mxu0 0
    %1687 = vmatpush1.bf16.msra.mxu0 %v282
    %1688 = vmatprep.subr.bf16.mxu0 0
    %1689 = vmatpush1.bf16.msra.mxu0 %v281
    %1690 = vmatprep.subr.bf16.mxu0 0
    %1691 = vmatpush2.bf16.msra.mxu0 0
    %1692 = vmatprep.subr.bf16.mxu0 0
    %1693 = vmatpush2.bf16.msra.mxu0 0
    %1694 = vmatprep.subr.bf16.mxu0 0
    %1695 = vmatpush2.bf16.msra.mxu0 0
    %1696 = vmatprep.subr.bf16.mxu0 0
    %1697 = vmatpush2.bf16.msra.mxu0 0
    %1698 = vmatprep.subr.bf16.mxu0 0
    %1699 = vmatpush2.bf16.msra.mxu0 0
    %1700 = vmatprep.subr.bf16.mxu0 0
    %1701 = vmatpush2.bf16.msra.mxu0 0
    %1702 = vmatprep.subr.bf16.mxu0 0
    %1703 = vmatpush2.bf16.msra.mxu0 0
    %1704 = vmatprep.subr.bf16.mxu0 0
    %1705 = vmatpush2.bf16.msra.mxu0 0
    %1706 = vmatprep.mubr.bf16.mxu0 0
    %1707 = vmatmul.mubr.bf16.gmra.mxu0 %v1672
    %v1708 = vpop.f32.mrf.mxu0
    %v1709 = vadd.f32 0.0, %v1708
    %v1710 = vpop.f32.mrf.mxu0
    %v1711 = vpop.f32.mrf.mxu0
    %v1712 = vpop.f32.mrf.mxu0
    %1713 = vdwg.mxu0
    %1715 = vrot.lane.b32.xlu0 %v1666, 32
    %v1716 = vpop.permute.xlu0 %1715
    %v1718 = vsel %vm200, %v1716, 0
    %1720 = vmatprep.subr.bf16.mxu0 0
    %1721 = vmatpush1.bf16.msra.mxu0 0
    %1722 = vmatprep.subr.bf16.mxu0 0
    %1723 = vmatpush1.bf16.msra.mxu0 0
    %1724 = vmatprep.subr.bf16.mxu0 0
    %1725 = vmatpush1.bf16.msra.mxu0 0
    %1726 = vmatprep.subr.bf16.mxu0 0
    %1727 = vmatpush1.bf16.msra.mxu0 0
    %1728 = vmatprep.subr.bf16.mxu0 0
    %1729 = vmatpush1.bf16.msra.mxu0 0
    %1730 = vmatprep.subr.bf16.mxu0 0
    %1731 = vmatpush1.bf16.msra.mxu0 0
    %1732 = vmatprep.subr.bf16.mxu0 0
    %1733 = vmatpush1.bf16.msra.mxu0 %v337
    %1734 = vmatprep.subr.bf16.mxu0 0
    %1735 = vmatpush1.bf16.msra.mxu0 %v336
    %1736 = vmatprep.subr.bf16.mxu0 0
    %1737 = vmatpush2.bf16.msra.mxu0 0
    %1738 = vmatprep.subr.bf16.mxu0 0
    %1739 = vmatpush2.bf16.msra.mxu0 0
    %1740 = vmatprep.subr.bf16.mxu0 0
    %1741 = vmatpush2.bf16.msra.mxu0 0
    %1742 = vmatprep.subr.bf16.mxu0 0
    %1743 = vmatpush2.bf16.msra.mxu0 0
    %1744 = vmatprep.subr.bf16.mxu0 0
    %1745 = vmatpush2.bf16.msra.mxu0 0
    %1746 = vmatprep.subr.bf16.mxu0 0
    %1747 = vmatpush2.bf16.msra.mxu0 0
    %1748 = vmatprep.subr.bf16.mxu0 0
    %1749 = vmatpush2.bf16.msra.mxu0 0
    %1750 = vmatprep.subr.bf16.mxu0 0
    %1751 = vmatpush2.bf16.msra.mxu0 0
    %1752 = vmatprep.mubr.bf16.mxu0 0
    %1753 = vmatmul.mubr.bf16.gmra.mxu0 %v1718
    %v1754 = vpop.f32.mrf.mxu0
    %v1755 = vadd.f32 %v1709, %v1754
    %v1756 = vpop.f32.mrf.mxu0
    %v1757 = vpop.f32.mrf.mxu0
    %v1758 = vpop.f32.mrf.mxu0
    %1759 = vdwg.mxu0
    %v1760 = vadd.f32 %v1755, %v387
    %v1761 = vxor.u32 %v1760, 2147483648
    %v1762 = vmul.f32 %v1761, 1.442695
    %v1763 = vpow.pop %v1762
    %v1764 = vadd.f32 %v1763, 1.0
    %v1765 = vrcp.pop %v1764
    %v1766 = vmul.f32 1.0, %v1765
    %v1767 = vmul.f32 %v1766, %v62
    %v1768 = vadd.f32 %v1767, %v63
    %v1769 = vmul.f32 %v1768, %v1592
    %1771 = vrot.lane.b32.xlu0 %v1768, 64
    %v1772 = vpop.permute.xlu0 %1771
    %v1774 = vmul.f32 %v1768, %v1772
    %1776 = vrot.lane.b32.xlu0 %v1774, 32
    %v1777 = vpop.permute.xlu0 %1776
    %v1779 = vadd.f32 %v1769, %v1777
    %v1780 = vtanh.pop %v1779
    %1782 = vrot.lane.b32.xlu0 %v1780, 64
    %v1783 = vpop.permute.xlu0 %1782
    %v1785 = vmul.f32 %v1768, %v1783
    %v1786 = vsel %vm1598, %v1785, %v1591
    %v1787 = vld [vmem:[%s8] sm:$0xff]
    %v1788 = vld [vmem:[%s8 + $0x8] sm:$0xff]
    %v1789 = vld [vmem:[%s8 + $0x10] sm:$0xff]
    %v1790 = vld [vmem:[%s8 + $0x18] sm:$0xff]
    %v1791 = vld [vmem:[%s9] sm:$0xff]
    %1793 = vrot.lane.b32.xlu0 %v1786, 32
    %v1794 = vpop.permute.xlu0 %1793
    %v1795 = vsel %vm200, %v1794, 0
    %1797 = vmatprep.subr.mxu0 0.0
    %1798 = vmatpush1.msra.mxu0 0.0
    %1799 = vmatprep.subr.mxu0 0.0
    %1800 = vmatpush1.msra.mxu0 0.0
    %1801 = vmatprep.subr.mxu0 0.0
    %1802 = vmatpush1.msra.mxu0 0.0
    %1803 = vmatprep.subr.mxu0 0.0
    %1804 = vmatpush1.msra.mxu0 0.0
    %1805 = vmatprep.subr.mxu0 0.0
    %1806 = vmatpush1.msra.mxu0 0.0
    %1807 = vmatprep.subr.mxu0 0.0
    %1808 = vmatpush1.msra.mxu0 0.0
    %1809 = vmatprep.subr.mxu0 0.0
    %1810 = vmatpush1.msra.mxu0 0.0
    %1811 = vmatprep.subr.mxu0 0.0
    %1812 = vmatpush1.msra.mxu0 0.0
    %1813 = vmatprep.subr.mxu0 0.0
    %1814 = vmatpush1.msra.mxu0 0.0
    %1815 = vmatprep.subr.mxu0 0.0
    %1816 = vmatpush1.msra.mxu0 0.0
    %1817 = vmatprep.subr.mxu0 0.0
    %1818 = vmatpush1.msra.mxu0 0.0
    %1819 = vmatprep.subr.mxu0 0.0
    %1820 = vmatpush1.msra.mxu0 0.0
    %1821 = vmatprep.subr.mxu0 0.0
    %1822 = vmatpush1.msra.mxu0 %v1790
    %1823 = vmatprep.subr.mxu0 0.0
    %1824 = vmatpush1.msra.mxu0 %v1789
    %1825 = vmatprep.subr.mxu0 0.0
    %1826 = vmatpush1.msra.mxu0 %v1788
    %1827 = vmatprep.subr.mxu0 0.0
    %1828 = vmatpush1.msra.mxu0 %v1787
    %1829 = vmatprep.subr.mxu0 0.0
    %1830 = vmatpush2.msra.mxu0 0.0
    %1831 = vmatprep.subr.mxu0 0.0
    %1832 = vmatpush2.msra.mxu0 0.0
    %1833 = vmatprep.subr.mxu0 0.0
    %1834 = vmatpush2.msra.mxu0 0.0
    %1835 = vmatprep.subr.mxu0 0.0
    %1836 = vmatpush2.msra.mxu0 0.0
    %1837 = vmatprep.subr.mxu0 0.0
    %1838 = vmatpush2.msra.mxu0 0.0
    %1839 = vmatprep.subr.mxu0 0.0
    %1840 = vmatpush2.msra.mxu0 0.0
    %1841 = vmatprep.subr.mxu0 0.0
    %1842 = vmatpush2.msra.mxu0 0.0
    %1843 = vmatprep.subr.mxu0 0.0
    %1844 = vmatpush2.msra.mxu0 0.0
    %1845 = vmatprep.subr.mxu0 0.0
    %1846 = vmatpush2.msra.mxu0 0.0
    %1847 = vmatprep.subr.mxu0 0.0
    %1848 = vmatpush2.msra.mxu0 0.0
    %1849 = vmatprep.subr.mxu0 0.0
    %1850 = vmatpush2.msra.mxu0 0.0
    %1851 = vmatprep.subr.mxu0 0.0
    %1852 = vmatpush2.msra.mxu0 0.0
    %1853 = vmatprep.subr.mxu0 0.0
    %1854 = vmatpush2.msra.mxu0 0.0
    %1855 = vmatprep.subr.mxu0 0.0
    %1856 = vmatpush2.msra.mxu0 0.0
    %1857 = vmatprep.subr.mxu0 0.0
    %1858 = vmatpush2.msra.mxu0 0.0
    %1859 = vmatprep.subr.mxu0 0.0
    %1860 = vmatpush2.msra.mxu0 0.0
    %1861 = vmatprep.mubr.f32.mxu0 0.0
    %1862 = vmatmul.mubr.f32.gmra.mxu0 %v1795
    %v1863 = vpop.f32.mrf.mxu0
    %v1864 = vadd.f32 %v1791, %v1863
    %v1865 = vpop.f32.mrf.mxu0
    %1866 = vdwg.mxu0
    %vm1867 = vcmp.ge.f32.partialorder %v1864, 0.0
    %v1868 = vmul.f32 %v1864, 0.01
    %v1869 = vsel %vm1867, %v1864, %v1868
    %v1870 = vld [vmem:[%s10] sm:$0xff]
    %v1871 = vld [vmem:[%s10 + $0x8] sm:$0xff]
    %v1872 = vld [vmem:[%s11] sm:$0x1]
    %v1874 = vlaneseq
    %v1875 = vshrl.u32 %v1874, 7
    %v1876 = vsub.s32 0, %v1875
    %v1877 = vrot.slane %v1872, %v1876
    %vm1879 = vcmask 130048
    %v1881 = vsel %vm1879, %v1869, 0
    %1883 = vmatprep.subr.mxu0 0.0
    %1884 = vmatpush1.msra.mxu0 0.0
    %1885 = vmatprep.subr.mxu0 0.0
    %1886 = vmatpush1.msra.mxu0 0.0
    %1887 = vmatprep.subr.mxu0 0.0
    %1888 = vmatpush1.msra.mxu0 0.0
    %1889 = vmatprep.subr.mxu0 0.0
    %1890 = vmatpush1.msra.mxu0 0.0
    %1891 = vmatprep.subr.mxu0 0.0
    %1892 = vmatpush1.msra.mxu0 0.0
    %1893 = vmatprep.subr.mxu0 0.0
    %1894 = vmatpush1.msra.mxu0 0.0
    %1895 = vmatprep.subr.mxu0 0.0
    %1896 = vmatpush1.msra.mxu0 0.0
    %1897 = vmatprep.subr.mxu0 0.0
    %1898 = vmatpush1.msra.mxu0 0.0
    %1899 = vmatprep.subr.mxu0 0.0
    %1900 = vmatpush1.msra.mxu0 0.0
    %1901 = vmatprep.subr.mxu0 0.0
    %1902 = vmatpush1.msra.mxu0 0.0
    %1903 = vmatprep.subr.mxu0 0.0
    %1904 = vmatpush1.msra.mxu0 0.0
    %1905 = vmatprep.subr.mxu0 0.0
    %1906 = vmatpush1.msra.mxu0 0.0
    %1907 = vmatprep.subr.mxu0 0.0
    %1908 = vmatpush1.msra.mxu0 0.0
    %1909 = vmatprep.subr.mxu0 0.0
    %1910 = vmatpush1.msra.mxu0 0.0
    %1911 = vmatprep.subr.mxu0 0.0
    %1912 = vmatpush1.msra.mxu0 %v1871
    %1913 = vmatprep.subr.mxu0 0.0
    %1914 = vmatpush1.msra.mxu0 %v1870
    %1915 = vmatprep.subr.mxu0 0.0
    %1916 = vmatpush2.msra.mxu0 0.0
    %1917 = vmatprep.subr.mxu0 0.0
    %1918 = vmatpush2.msra.mxu0 0.0
    %1919 = vmatprep.subr.mxu0 0.0
    %1920 = vmatpush2.msra.mxu0 0.0
    %1921 = vmatprep.subr.mxu0 0.0
    %1922 = vmatpush2.msra.mxu0 0.0
    %1923 = vmatprep.subr.mxu0 0.0
    %1924 = vmatpush2.msra.mxu0 0.0
    %1925 = vmatprep.subr.mxu0 0.0
    %1926 = vmatpush2.msra.mxu0 0.0
    %1927 = vmatprep.subr.mxu0 0.0
    %1928 = vmatpush2.msra.mxu0 0.0
    %1929 = vmatprep.subr.mxu0 0.0
    %1930 = vmatpush2.msra.mxu0 0.0
    %1931 = vmatprep.subr.mxu0 0.0
    %1932 = vmatpush2.msra.mxu0 0.0
    %1933 = vmatprep.subr.mxu0 0.0
    %1934 = vmatpush2.msra.mxu0 0.0
    %1935 = vmatprep.subr.mxu0 0.0
    %1936 = vmatpush2.msra.mxu0 0.0
    %1937 = vmatprep.subr.mxu0 0.0
    %1938 = vmatpush2.msra.mxu0 0.0
    %1939 = vmatprep.subr.mxu0 0.0
    %1940 = vmatpush2.msra.mxu0 0.0
    %1941 = vmatprep.subr.mxu0 0.0
    %1942 = vmatpush2.msra.mxu0 0.0
    %1943 = vmatprep.subr.mxu0 0.0
    %1944 = vmatpush2.msra.mxu0 0.0
    %1945 = vmatprep.subr.mxu0 0.0
    %1946 = vmatpush2.msra.mxu0 0.0
    %1947 = vmatprep.mubr.f32.mxu0 0.0
    %1948 = vmatmul.mubr.f32.gmra.mxu0 %v1881
    %v1949 = vpop.f32.mrf.mxu0
    %v1950 = vadd.f32 %v1877, %v1949
    %v1951 = vpop.f32.mrf.mxu0
    %1952 = vdwg.mxu0
    %1953 = vst [vmem:[#allocation2] sm:$0xff] %v1950
    // Predicated region
    $region50: #{tpu_custom_call.1} parent=1 // pred_check
      _
    $region51: #{tpu_custom_call.1} parent=1 // pred_check_branch
      %1955 = sbr.rel (0) target = $region53
    $region52: #{tpu_custom_call.1} parent=1 // pred_region
      %s1957 = ssub.s32 128, 128
      %1958 = vsyncadd [#allocation3], %s1957
      %s1960 = sshll.u32 [#allocation2], 4
      %s1961 = int_to_ptr.vmem [resolvable:$true] %s1960
      %1963 = dma.vmem_to_hbm [thread:$0]  %s1961, 128, %s12, [#allocation3]
    $region53: #{tpu_custom_call.1} parent=1 // pred_fallthru
      _
    // Predicated region
    $region54: #{tpu_custom_call.1} parent=1 // pred_check
      _
    $region55: #{tpu_custom_call.1} parent=1 // pred_check_branch
      %1965 = sbr.rel (0) target = $region57
    $region56: #{tpu_custom_call.1} parent=1 // pred_region
      %1966 = dma.done [#allocation3], 128
    $region57: #{tpu_custom_call.1} parent=1 // pred_fallthru
      _
    %1967 = vsyncpa [#allocation3], 1

</llo_original>
